<compile_context>
chip_gen: v7x
topology: tpu7x:2x2x1
jax: 0.10.0
libtpu: 0.0.40
codegen_flags: <defaults>
</compile_context>

<pallas_src>
import jax
import jax.numpy as jnp
from jax.experimental import pallas as pl
from jax.experimental.pallas import tpu as pltpu

N_IN, N_H1, N_H2, N_OUT = 784, 128, 64, 10
N_H2_P, N_OUT_P = 128, 128      # narrow feature dims padded to lane width 128
TB = 256                        # batch tile; B=500 -> 2 grid steps (one per v7x TC)
NEG_BIG = -1e30                 # folded class-lane mask (exp -> 0 on padded lanes)


def mlp_kernel(x_ref, w1_ref, b1_ref, w2_ref, b2_ref, w3_ref, b3_ref, o_ref):
    # x arrives as raw f32 straight from HBM; cast to bf16 on the VPU under the DMA.
    x = x_ref[...].astype(jnp.bfloat16)

    # Layer 1: Linear(784->128) on the MXU (bf16 in, f32 accumulate) + bias + ReLU in f32.
    h1 = jnp.dot(x, w1_ref[...], preferred_element_type=jnp.float32)
    h1 = jnp.maximum(h1 + b1_ref[...], 0.0)

    # Layer 2: Linear(128->128 padded); padded w2/b2 columns are 0, so padded h2 lanes stay 0.
    h2 = jnp.dot(h1.astype(jnp.bfloat16), w2_ref[...], preferred_element_type=jnp.float32)
    h2 = jnp.maximum(h2 + b2_ref[...], 0.0)

    # Layer 3: Linear(128->128 padded). Padded b3 lanes hold -1e30, so the class-lane mask
    # is already folded into the bias: padded logits ~ -1e30 and exp() -> 0. No iota/where.
    logits = jnp.dot(h2.astype(jnp.bfloat16), w3_ref[...], preferred_element_type=jnp.float32)
    logits = logits + b3_ref[...]

    # Numerically-stable softmax over dim=1 with exact normalization (all in f32, v5e-safe).
    m = jnp.max(logits, axis=-1, keepdims=True)
    e = jnp.exp(logits - m)
    denom = jnp.sum(e, axis=-1, keepdims=True)
    o_ref[...] = (e / denom).astype(o_ref.dtype)


def nn_forward(x, kparams):
    """x: (B, 784) float32 (unpadded).  kparams: padded / bf16 kernel params from prepare_params()."""
    B = x.shape[0]
    nb = pl.cdiv(B, TB)

    w1t, b1 = kparams["w1t"], kparams["b1"]
    w2t, b2 = kparams["w2t"], kparams["b2"]
    w3t, b3 = kparams["w3t"], kparams["b3"]

    def resident(a):
        # Full-array block with a constant index_map -> fetched once, stays in VMEM
        # across all batch-grid iterations (zero per-step DMA for weights / biases).
        return pl.BlockSpec(a.shape, lambda i: (0,) * a.ndim)

    flops = 2 * B * (N_IN * N_H1 + N_H1 * N_H2_P + N_H2_P * N_OUT_P)
    bytes_accessed = (x.size * 4
                      + (w1t.size + w2t.size + w3t.size) * 2
                      + (b1.size + b2.size + b3.size) * 4
                      + B * N_OUT_P * 2)

    out_p = pl.pallas_call(
        mlp_kernel,
        out_shape=jax.ShapeDtypeStruct((B, N_OUT_P), jnp.bfloat16),
        grid=(nb,),
        in_specs=[
            # x tiled over batch; last dim = full array dim (784) satisfies the (8,128) rule,
            # and the last (partial) batch block is handled by Pallas, not an explicit pad.
            pl.BlockSpec((TB, N_IN), lambda i: (i, 0)),
            resident(w1t), resident(b1),
            resident(w2t), resident(b2),
            resident(w3t), resident(b3),
        ],
        # 128-lane-wide bf16 output block -> unmasked, lane-dense stores, half the writeback.
        out_specs=pl.BlockSpec((TB, N_OUT_P), lambda i: (i, 0)),
        compiler_params=pltpu.CompilerParams(
            dimension_semantics=("parallel",)),              # v7x: shard batch over both TCs
        cost_estimate=pl.CostEstimate(
            flops=flops,
            transcendentals=B * N_OUT_P,
            bytes_accessed=bytes_accessed),
    )(x, w1t, b1, w2t, b2, w3t, b3)

    # Drop only the padded class lanes in the wrapper (rows are already exact).
    return out_p[:, :N_OUT]


def init_params(key):
    """PyTorch nn.Linear default init U(-1/sqrt(fan_in), 1/sqrt(fan_in)); weights are (out, in)."""
    ks = jax.random.split(key, 6)

    def linear(kw, kb, fan_in, fan_out):
        bound = 1.0 / jnp.sqrt(fan_in)
        w = jax.random.uniform(kw, (fan_out, fan_in), jnp.float32, -bound, bound)
        b = jax.random.uniform(kb, (fan_out,), jnp.float32, -bound, bound)
        return w, b

    w1, b1 = linear(ks[0], ks[1], N_IN, N_H1)
    w2, b2 = linear(ks[2], ks[3], N_H1, N_H2)
    w3, b3 = linear(ks[4], ks[5], N_H2, N_OUT)
    return {"w1": w1, "b1": b1, "w2": w2, "b2": b2, "w3": w3, "b3": b3}


def prepare_params(p):
    """Transpose to (in, out), zero-pad narrow dims to lane width 128, cast weights to bf16.
    The padded class lanes of b3 are set to -1e30 so the kernel needs no explicit mask."""
    w1t = p["w1"].T.astype(jnp.bfloat16)                                                        # (784,128)
    w2t = jnp.pad(p["w2"].T, ((0, 0), (0, N_H2_P - N_H2))).astype(jnp.bfloat16)                 # (128,128)
    w3t = jnp.pad(p["w3"].T, ((0, N_H2_P - N_H2), (0, N_OUT_P - N_OUT))).astype(jnp.bfloat16)   # (128,128)
    b1 = p["b1"].reshape(1, N_H1).astype(jnp.float32)                                           # (1,128)
    b2 = jnp.pad(p["b2"], (0, N_H2_P - N_H2)).reshape(1, N_H2_P).astype(jnp.float32)            # (1,128)
    b3 = jnp.pad(p["b3"], (0, N_OUT_P - N_OUT),
                 constant_values=NEG_BIG).reshape(1, N_OUT_P).astype(jnp.float32)                # (1,128)
    return {"w1t": w1t, "b1": b1, "w2t": w2t, "b2": b2, "w3t": w3t, "b3": b3}


def nn_forward_ref(x, p):
    """Pure f32 JAX reference with the exact PyTorch module semantics."""
    h1 = jnp.maximum(x @ p["w1"].T + p["b1"], 0.0)
    h2 = jnp.maximum(h1 @ p["w2"].T + p["b2"], 0.0)
    logits = h2 @ p["w3"].T + p["b3"]
    return jax.nn.softmax(logits, axis=1)


if __name__ == "__main__":
    key = jax.random.PRNGKey(0)
    k_x, k_p = jax.random.split(key)

    B = 500                                    # deliberately not a multiple of TB (partial block)
    x = jax.random.normal(k_x, (B, N_IN), dtype=jnp.float32)
    params = init_params(k_p)
    kparams = prepare_params(params)

    out = jax.block_until_ready(nn_forward(x, kparams))
    ref = nn_forward_ref(x, params)

    assert out.shape == (B, N_OUT)
    out_f32 = out.astype(jnp.float32)
    # Only the first B rows are real; padded lanes were already sliced off.
    assert bool(jnp.all(jnp.isfinite(out_f32)))
    # bf16 matmul inputs + bf16 output => loosened tolerance vs. the pure-f32 reference.
    assert jnp.allclose(out_f32, ref, atol=1e-2, rtol=1e-2), float(jnp.max(jnp.abs(out_f32 - ref)))
    # rows of a softmax must sum to (approximately) 1 (exact f32 division, bf16 store rounding).
    assert jnp.allclose(jnp.sum(out_f32, axis=1), jnp.ones((B,)), atol=5e-3)

    print("KERNEL_OK")
</pallas_src>

<mosaic_0001>
module attributes {stable_mosaic.version = 11 : i64} {
  func.func @mlp_kernel(%arg0: i32, %arg1: memref<256x784xf32, #tpu.memory_space<vmem>>, %arg2: memref<784x128xbf16, #tpu.memory_space<vmem>>, %arg3: memref<1x128xf32, #tpu.memory_space<vmem>>, %arg4: memref<128x128xbf16, #tpu.memory_space<vmem>>, %arg5: memref<1x128xf32, #tpu.memory_space<vmem>>, %arg6: memref<128x128xbf16, #tpu.memory_space<vmem>>, %arg7: memref<1x128xf32, #tpu.memory_space<vmem>>, %arg8: memref<256x128xbf16, #tpu.memory_space<vmem>>) attributes {dimension_semantics = [#tpu.dimension_semantics<parallel>], iteration_bounds = array<i64: 2>, scalar_prefetch = 0 : i64, scratch_operands = 0 : i64, tpu.core_type = #tpu.core_type<tc>, window_params = [{transform_indices = @transform_0, window_bounds = array<i64: 256, 784>}, {pipeline_mode = #tpu.pipeline_mode<synchronous>, transform_indices = @transform_1, window_bounds = array<i64: 784, 128>}, {pipeline_mode = #tpu.pipeline_mode<synchronous>, transform_indices = @transform_2, window_bounds = array<i64: 1, 128>}, {pipeline_mode = #tpu.pipeline_mode<synchronous>, transform_indices = @transform_3, window_bounds = array<i64: 128, 128>}, {pipeline_mode = #tpu.pipeline_mode<synchronous>, transform_indices = @transform_4, window_bounds = array<i64: 1, 128>}, {pipeline_mode = #tpu.pipeline_mode<synchronous>, transform_indices = @transform_5, window_bounds = array<i64: 128, 128>}, {pipeline_mode = #tpu.pipeline_mode<synchronous>, transform_indices = @transform_6, window_bounds = array<i64: 1, 128>}, {transform_indices = @transform_7, window_bounds = array<i64: 256, 128>}]} {
    %c0 = arith.constant 0 : index
    %c0_0 = arith.constant 0 : index
    %0 = vector.load %arg1[%c0, %c0_0] : memref<256x784xf32, #tpu.memory_space<vmem>>, vector<256x784xf32>
    %1 = arith.truncf %0 : vector<256x784xf32> to vector<256x784xbf16>
    %c0_1 = arith.constant 0 : index
    %c0_2 = arith.constant 0 : index
    %2 = vector.load %arg2[%c0_1, %c0_2] : memref<784x128xbf16, #tpu.memory_space<vmem>>, vector<784x128xbf16>
    %cst = arith.constant dense<0.000000e+00> : vector<256x128xf32>
    %3 = tpu.matmul %1, %2, %cst {dimension_numbers = #tpu.dot_dimension_numbers<[1], [0], [0], [1], [0, 0, 1, 1], [], []>} : vector<256x784xbf16>, vector<784x128xbf16>, vector<256x128xf32> -> vector<256x128xf32>
    %c0_3 = arith.constant 0 : index
    %c0_4 = arith.constant 0 : index
    %4 = vector.load %arg3[%c0_3, %c0_4] : memref<1x128xf32, #tpu.memory_space<vmem>>, vector<1x128xf32>
    %5 = vector.broadcast %4 : vector<1x128xf32> to vector<256x128xf32>
    %6 = arith.addf %3, %5 : vector<256x128xf32>
    %cst_5 = arith.constant 0.000000e+00 : f32
    %7 = vector.broadcast %cst_5 : f32 to vector<256x128xf32>
    %8 = arith.maximumf %6, %7 : vector<256x128xf32>
    %9 = arith.truncf %8 : vector<256x128xf32> to vector<256x128xbf16>
    %c0_6 = arith.constant 0 : index
    %c0_7 = arith.constant 0 : index
    %10 = vector.load %arg4[%c0_6, %c0_7] : memref<128x128xbf16, #tpu.memory_space<vmem>>, vector<128x128xbf16>
    %cst_8 = arith.constant dense<0.000000e+00> : vector<256x128xf32>
    %11 = tpu.matmul %9, %10, %cst_8 {dimension_numbers = #tpu.dot_dimension_numbers<[1], [0], [0], [1], [0, 0, 1, 1], [], []>} : vector<256x128xbf16>, vector<128x128xbf16>, vector<256x128xf32> -> vector<256x128xf32>
    %c0_9 = arith.constant 0 : index
    %c0_10 = arith.constant 0 : index
    %12 = vector.load %arg5[%c0_9, %c0_10] : memref<1x128xf32, #tpu.memory_space<vmem>>, vector<1x128xf32>
    %13 = vector.broadcast %12 : vector<1x128xf32> to vector<256x128xf32>
    %14 = arith.addf %11, %13 : vector<256x128xf32>
    %cst_11 = arith.constant 0.000000e+00 : f32
    %15 = vector.broadcast %cst_11 : f32 to vector<256x128xf32>
    %16 = arith.maximumf %14, %15 : vector<256x128xf32>
    %17 = arith.truncf %16 : vector<256x128xf32> to vector<256x128xbf16>
    %c0_12 = arith.constant 0 : index
    %c0_13 = arith.constant 0 : index
    %18 = vector.load %arg6[%c0_12, %c0_13] : memref<128x128xbf16, #tpu.memory_space<vmem>>, vector<128x128xbf16>
    %cst_14 = arith.constant dense<0.000000e+00> : vector<256x128xf32>
    %19 = tpu.matmul %17, %18, %cst_14 {dimension_numbers = #tpu.dot_dimension_numbers<[1], [0], [0], [1], [0, 0, 1, 1], [], []>} : vector<256x128xbf16>, vector<128x128xbf16>, vector<256x128xf32> -> vector<256x128xf32>
    %c0_15 = arith.constant 0 : index
    %c0_16 = arith.constant 0 : index
    %20 = vector.load %arg7[%c0_15, %c0_16] : memref<1x128xf32, #tpu.memory_space<vmem>>, vector<1x128xf32>
    %21 = vector.broadcast %20 : vector<1x128xf32> to vector<256x128xf32>
    %22 = arith.addf %19, %21 : vector<256x128xf32>
    %cst_17 = arith.constant dense<0xFF800000> : vector<256xf32>
    %23 = vector.multi_reduction <maximumf>, %22, %cst_17 [1] : vector<256x128xf32> to vector<256xf32>
    %24 = vector.shape_cast %23 : vector<256xf32> to vector<256x1xf32>
    %25 = vector.broadcast %24 : vector<256x1xf32> to vector<256x128xf32>
    %26 = arith.subf %22, %25 : vector<256x128xf32>
    %27 = math.exp %26 : vector<256x128xf32>
    %cst_18 = arith.constant dense<0.000000e+00> : vector<256xf32>
    %28 = vector.multi_reduction <add>, %27, %cst_18 [1] : vector<256x128xf32> to vector<256xf32>
    %29 = vector.shape_cast %28 : vector<256xf32> to vector<256x1xf32>
    %30 = vector.broadcast %29 : vector<256x1xf32> to vector<256x128xf32>
    %31 = arith.divf %27, %30 : vector<256x128xf32>
    %32 = arith.truncf %31 : vector<256x128xf32> to vector<256x128xbf16>
    %c0_19 = arith.constant 0 : index
    %c0_20 = arith.constant 0 : index
    %33 = vector.load %arg8[%c0_19, %c0_20] : memref<256x128xbf16, #tpu.memory_space<vmem>>, vector<256x128xbf16>
    tpu.vector_store %arg8[%c0_19, %c0_20], %32 {strides = array<i32>} : memref<256x128xbf16, #tpu.memory_space<vmem>>, vector<256x128xbf16>,
    return
  }
  func.func @transform_0(%arg0: i32) -> (i32, i32) {
    %c0_i32 = arith.constant 0 : i32
    %c0_i32_0 = arith.constant 0 : i32
    return %arg0, %c0_i32 : i32, i32
  }
  func.func @transform_1(%arg0: i32) -> (i32, i32) {
    %c0_i32 = arith.constant 0 : i32
    %c0_i32_0 = arith.constant 0 : i32
    %c0_i32_1 = arith.constant 0 : i32
    return %c0_i32, %c0_i32_0 : i32, i32
  }
  func.func @transform_2(%arg0: i32) -> (i32, i32) {
    %c0_i32 = arith.constant 0 : i32
    %c0_i32_0 = arith.constant 0 : i32
    %c0_i32_1 = arith.constant 0 : i32
    return %c0_i32, %c0_i32_0 : i32, i32
  }
  func.func @transform_3(%arg0: i32) -> (i32, i32) {
    %c0_i32 = arith.constant 0 : i32
    %c0_i32_0 = arith.constant 0 : i32
    %c0_i32_1 = arith.constant 0 : i32
    return %c0_i32, %c0_i32_0 : i32, i32
  }
  func.func @transform_4(%arg0: i32) -> (i32, i32) {
    %c0_i32 = arith.constant 0 : i32
    %c0_i32_0 = arith.constant 0 : i32
    %c0_i32_1 = arith.constant 0 : i32
    return %c0_i32, %c0_i32_0 : i32, i32
  }
  func.func @transform_5(%arg0: i32) -> (i32, i32) {
    %c0_i32 = arith.constant 0 : i32
    %c0_i32_0 = arith.constant 0 : i32
    %c0_i32_1 = arith.constant 0 : i32
    return %c0_i32, %c0_i32_0 : i32, i32
  }
  func.func @transform_6(%arg0: i32) -> (i32, i32) {
    %c0_i32 = arith.constant 0 : i32
    %c0_i32_0 = arith.constant 0 : i32
    %c0_i32_1 = arith.constant 0 : i32
    return %c0_i32, %c0_i32_0 : i32, i32
  }
  func.func @transform_7(%arg0: i32) -> (i32, i32) {
    %c0_i32 = arith.constant 0 : i32
    %c0_i32_0 = arith.constant 0 : i32
    return %arg0, %c0_i32 : i32, i32
  }
}

</mosaic_0001>

<llo_original>
// kernel: tpu_custom_call.1
$region0: #{tpu_custom_call.1}
  #allocation0 [shape = 'u32[]', space=smem, size = 0x4, offset = 0x4, fixed_abs, tag = 'smem constant byte address 0x4 - core index']
  #allocation1 [shape = 'u32[144,128]{1,0:T(1,128)}', space=vmem, size = 0x12000, scoped, tag = 'internal scratch']
  %s0 = inlined_call_operand.vmem [shape: f32[500,784], index: 0, kind: input, shape index: {}]
  %s1 = inlined_call_operand.vmem [shape: bf16[784,128], index: 1, kind: input, shape index: {}]
  %s2 = inlined_call_operand.vmem [shape: f32[1,128], index: 2, kind: input, shape index: {}]
  %s3 = inlined_call_operand.vmem [shape: bf16[128,128], index: 3, kind: input, shape index: {}]
  %s4 = inlined_call_operand.vmem [shape: f32[1,128], index: 4, kind: input, shape index: {}]
  %s5 = inlined_call_operand.vmem [shape: bf16[128,128], index: 5, kind: input, shape index: {}]
  %s6 = inlined_call_operand.vmem [shape: f32[1,128], index: 6, kind: input, shape index: {}]
  %s7 = inlined_call_operand.hbm [shape: bf16[500,128], index: 7, kind: output, shape index: {}]
  %s8 = sld [smem:[#allocation0]]
  $region61: #{tpu_custom_call.1} parent=0
    _
  %s10 = ssub.s32 1, %s8
  %s11 = scalar_select 0, %s10, %s8
  $region1: #{tpu_custom_call.1} parent=0
    #allocation2 [shape = 'u8[131072]{0}', space=vmem, size = 0x20000, scoped, tag = 'output window, operand 0']
    #allocation3 [shape = 's32[2]{0}', space=sflag, size = 0x8, scoped, tag = 'scoped memory for tpu_custom_call.1']
    %12 = vsyncpa [#allocation3], 0
    %s13 = scalar_lea.sflag [#allocation3], 1
    %14 = vsyncpa %s13, 0
    loop: start=0, step=1, limit=4
    $region2: #{tpu_custom_call.1} parent=1 // loop_pre_header
      _
    $region3: #{tpu_custom_call.1} parent=1 // loop_header
      %s16 = sphi 0, %s20
      %p17 = scmp.ge.s32.totalorder %s16, 4
      %s26 = sphi 0, %s28
      %s29 = sphi 0, %s26
      %s30 = sphi 0, %s29
      %s46 = sphi 0, %s30
      %s50 = sphi 0, %s50
      %s52 = sphi 0, %s50
      %s53 = sphi 0, %s52
      %s67 = sphi 0, %s53
      %s71 = sphi 0, %s71
      %s73 = sphi 0, %s71
      %s74 = sphi 0, %s73
      %s88 = sphi 0, %s74
      %s92 = sphi 0, %s92
      %s94 = sphi 0, %s92
      %s95 = sphi 0, %s94
      %s109 = sphi 0, %s95
      %s113 = sphi 0, %s113
      %s115 = sphi 0, %s113
      %s116 = sphi 0, %s115
      %s130 = sphi 0, %s116
      %s134 = sphi 0, %s134
      %s136 = sphi 0, %s134
      %s137 = sphi 0, %s136
      %s151 = sphi 0, %s137
      %s155 = sphi 0, %s155
      %s157 = sphi 0, %s155
      %s158 = sphi 0, %s157
      %s172 = sphi 0, %s158
      %s178 = sphi 0, %s180
      %s181 = sphi 0, %s178
      %s182 = sphi 0, %s181
      %s198 = sphi 0, %s182
    $region4: #{tpu_custom_call.1} parent=1 // loop_header_branch
      %19 = sbr.rel (%p17) target = $region8
    $region5: #{tpu_custom_call.1} parent=1 // loop_body
      %s21 = ssub.s32 %s16, 1
      %s22 = ssub.s32 %s16, 2
      %s23 = sadd.s32 %s16, 1
      %s24 = ssub.s32 %s16, %s23
      %p25 = scmp.eq.s32.totalorder %s24, 0
      %s27 = sadd.s32 %s26, 1
      %s28 = scalar_select %p25, %s26, %s27
      %p31 = pneg %p25
      %p32 = scmp.eq.s32.totalorder %s16, 1
      %p33 = por %p31, %p32
      %p34 = scmp.ne.s32.totalorder %s26, %s29
      %p35 = scmp.eq.s32.totalorder %s16, 0
      %p36 = por %p34, %p35
      %p37 = scmp.ne.s32.totalorder %s26, %s29
      %p38 = scmp.eq.s32.totalorder %s21, 1
      %p39 = por %p37, %p38
      %p40 = scmp.ne.s32.totalorder %s29, %s30
      %p41 = scmp.eq.s32.totalorder %s21, 0
      %p42 = por %p40, %p41
      %p43 = scmp.ne.s32.totalorder %s29, %s30
      %p44 = scmp.eq.s32.totalorder %s22, 1
      %p45 = por %p43, %p44
      %p47 = scmp.ne.s32.totalorder %s30, %s46
      %p48 = scmp.eq.s32.totalorder %s22, 0
      %p49 = por %p47, %p48
      %s51 = sadd.s32 %s50, 1
      %p54 = scmp.eq.s32.totalorder %s16, 1
      %p55 = scmp.ne.s32.totalorder %s50, %s52
      %p56 = scmp.eq.s32.totalorder %s16, 0
      %p57 = por %p55, %p56
      %p58 = scmp.ne.s32.totalorder %s50, %s52
      %p59 = scmp.eq.s32.totalorder %s21, 1
      %p60 = por %p58, %p59
      %p61 = scmp.ne.s32.totalorder %s52, %s53
      %p62 = scmp.eq.s32.totalorder %s21, 0
      %p63 = por %p61, %p62
      %p64 = scmp.ne.s32.totalorder %s52, %s53
      %p65 = scmp.eq.s32.totalorder %s22, 1
      %p66 = por %p64, %p65
      %p68 = scmp.ne.s32.totalorder %s53, %s67
      %p69 = scmp.eq.s32.totalorder %s22, 0
      %p70 = por %p68, %p69
      %s72 = sadd.s32 %s71, 1
      %p75 = scmp.eq.s32.totalorder %s16, 1
      %p76 = scmp.ne.s32.totalorder %s71, %s73
      %p77 = scmp.eq.s32.totalorder %s16, 0
      %p78 = por %p76, %p77
      %p79 = scmp.ne.s32.totalorder %s71, %s73
      %p80 = scmp.eq.s32.totalorder %s21, 1
      %p81 = por %p79, %p80
      %p82 = scmp.ne.s32.totalorder %s73, %s74
      %p83 = scmp.eq.s32.totalorder %s21, 0
      %p84 = por %p82, %p83
      %p85 = scmp.ne.s32.totalorder %s73, %s74
      %p86 = scmp.eq.s32.totalorder %s22, 1
      %p87 = por %p85, %p86
      %p89 = scmp.ne.s32.totalorder %s74, %s88
      %p90 = scmp.eq.s32.totalorder %s22, 0
      %p91 = por %p89, %p90
      %s93 = sadd.s32 %s92, 1
      %p96 = scmp.eq.s32.totalorder %s16, 1
      %p97 = scmp.ne.s32.totalorder %s92, %s94
      %p98 = scmp.eq.s32.totalorder %s16, 0
      %p99 = por %p97, %p98
      %p100 = scmp.ne.s32.totalorder %s92, %s94
      %p101 = scmp.eq.s32.totalorder %s21, 1
      %p102 = por %p100, %p101
      %p103 = scmp.ne.s32.totalorder %s94, %s95
      %p104 = scmp.eq.s32.totalorder %s21, 0
      %p105 = por %p103, %p104
      %p106 = scmp.ne.s32.totalorder %s94, %s95
      %p107 = scmp.eq.s32.totalorder %s22, 1
      %p108 = por %p106, %p107
      %p110 = scmp.ne.s32.totalorder %s95, %s109
      %p111 = scmp.eq.s32.totalorder %s22, 0
      %p112 = por %p110, %p111
      %s114 = sadd.s32 %s113, 1
      %p117 = scmp.eq.s32.totalorder %s16, 1
      %p118 = scmp.ne.s32.totalorder %s113, %s115
      %p119 = scmp.eq.s32.totalorder %s16, 0
      %p120 = por %p118, %p119
      %p121 = scmp.ne.s32.totalorder %s113, %s115
      %p122 = scmp.eq.s32.totalorder %s21, 1
      %p123 = por %p121, %p122
      %p124 = scmp.ne.s32.totalorder %s115, %s116
      %p125 = scmp.eq.s32.totalorder %s21, 0
      %p126 = por %p124, %p125
      %p127 = scmp.ne.s32.totalorder %s115, %s116
      %p128 = scmp.eq.s32.totalorder %s22, 1
      %p129 = por %p127, %p128
      %p131 = scmp.ne.s32.totalorder %s116, %s130
      %p132 = scmp.eq.s32.totalorder %s22, 0
      %p133 = por %p131, %p132
      %s135 = sadd.s32 %s134, 1
      %p138 = scmp.eq.s32.totalorder %s16, 1
      %p139 = scmp.ne.s32.totalorder %s134, %s136
      %p140 = scmp.eq.s32.totalorder %s16, 0
      %p141 = por %p139, %p140
      %p142 = scmp.ne.s32.totalorder %s134, %s136
      %p143 = scmp.eq.s32.totalorder %s21, 1
      %p144 = por %p142, %p143
      %p145 = scmp.ne.s32.totalorder %s136, %s137
      %p146 = scmp.eq.s32.totalorder %s21, 0
      %p147 = por %p145, %p146
      %p148 = scmp.ne.s32.totalorder %s136, %s137
      %p149 = scmp.eq.s32.totalorder %s22, 1
      %p150 = por %p148, %p149
      %p152 = scmp.ne.s32.totalorder %s137, %s151
      %p153 = scmp.eq.s32.totalorder %s22, 0
      %p154 = por %p152, %p153
      %s156 = sadd.s32 %s155, 1
      %p159 = scmp.eq.s32.totalorder %s16, 1
      %p160 = scmp.ne.s32.totalorder %s155, %s157
      %p161 = scmp.eq.s32.totalorder %s16, 0
      %p162 = por %p160, %p161
      %p163 = scmp.ne.s32.totalorder %s155, %s157
      %p164 = scmp.eq.s32.totalorder %s21, 1
      %p165 = por %p163, %p164
      %p166 = scmp.ne.s32.totalorder %s157, %s158
      %p167 = scmp.eq.s32.totalorder %s21, 0
      %p168 = por %p166, %p167
      %p169 = scmp.ne.s32.totalorder %s157, %s158
      %p170 = scmp.eq.s32.totalorder %s22, 1
      %p171 = por %p169, %p170
      %p173 = scmp.ne.s32.totalorder %s158, %s172
      %p174 = scmp.eq.s32.totalorder %s22, 0
      %p175 = por %p173, %p174
      %s176 = ssub.s32 %s16, %s23
      %p177 = scmp.eq.s32.totalorder %s176, 0
      %s179 = sadd.s32 %s178, 1
      %s180 = scalar_select %p177, %s178, %s179
      %p183 = pneg %p177
      %p184 = scmp.eq.s32.totalorder %s16, 1
      %p185 = por %p183, %p184
      %p186 = scmp.ne.s32.totalorder %s178, %s181
      %p187 = scmp.eq.s32.totalorder %s16, 0
      %p188 = por %p186, %p187
      %p189 = scmp.ne.s32.totalorder %s178, %s181
      %p190 = scmp.eq.s32.totalorder %s21, 1
      %p191 = por %p189, %p190
      %p192 = scmp.ne.s32.totalorder %s181, %s182
      %p193 = scmp.eq.s32.totalorder %s21, 0
      %p194 = por %p192, %p193
      %p195 = scmp.ne.s32.totalorder %s181, %s182
      %p196 = scmp.eq.s32.totalorder %s22, 1
      %p197 = por %p195, %p196
      %p199 = scmp.ne.s32.totalorder %s182, %s198
      %p200 = scmp.eq.s32.totalorder %s22, 0
      %p201 = por %p199, %p200
      %p202 = scmp.le.s32.totalorder 1, %s16
      %p203 = scmp.lt.s32.totalorder %s16, 3
      %p204 = pnand %p202, %p203
      %p205 = pneg %p204
      // Predicated region
      $region9: #{tpu_custom_call.1} parent=5 // pred_check
        _
      $region10: #{tpu_custom_call.1} parent=5 // pred_check_branch
        %207 = sbr.rel (%p204) target = $region12
      $region11: #{tpu_custom_call.1} parent=5 // pred_region
        %s208 = ssub.s32 %s16, 1
        // Predicated region
        $region13: #{tpu_custom_call.1} parent=11 // pred_check
          %p209 = pneg %p63
        $region14: #{tpu_custom_call.1} parent=11 // pred_check_branch
          %211 = sbr.rel (%p209) target = $region16
        $region15: #{tpu_custom_call.1} parent=11 // pred_region
          _
        $region16: #{tpu_custom_call.1} parent=11 // pred_fallthru
          _
        // Predicated region
        $region17: #{tpu_custom_call.1} parent=11 // pred_check
          %p212 = pneg %p84
        $region18: #{tpu_custom_call.1} parent=11 // pred_check_branch
          %214 = sbr.rel (%p212) target = $region20
        $region19: #{tpu_custom_call.1} parent=11 // pred_region
          _
        $region20: #{tpu_custom_call.1} parent=11 // pred_fallthru
          _
        // Predicated region
        $region21: #{tpu_custom_call.1} parent=11 // pred_check
          %p215 = pneg %p105
        $region22: #{tpu_custom_call.1} parent=11 // pred_check_branch
          %217 = sbr.rel (%p215) target = $region24
        $region23: #{tpu_custom_call.1} parent=11 // pred_region
          _
        $region24: #{tpu_custom_call.1} parent=11 // pred_fallthru
          _
        // Predicated region
        $region25: #{tpu_custom_call.1} parent=11 // pred_check
          %p218 = pneg %p126
        $region26: #{tpu_custom_call.1} parent=11 // pred_check_branch
          %220 = sbr.rel (%p218) target = $region28
        $region27: #{tpu_custom_call.1} parent=11 // pred_region
          _
        $region28: #{tpu_custom_call.1} parent=11 // pred_fallthru
          _
        // Predicated region
        $region29: #{tpu_custom_call.1} parent=11 // pred_check
          %p221 = pneg %p147
        $region30: #{tpu_custom_call.1} parent=11 // pred_check_branch
          %223 = sbr.rel (%p221) target = $region32
        $region31: #{tpu_custom_call.1} parent=11 // pred_region
          _
        $region32: #{tpu_custom_call.1} parent=11 // pred_fallthru
          _
        // Predicated region
        $region33: #{tpu_custom_call.1} parent=11 // pred_check
          %p224 = pneg %p168
        $region34: #{tpu_custom_call.1} parent=11 // pred_check_branch
          %226 = sbr.rel (%p224) target = $region36
        $region35: #{tpu_custom_call.1} parent=11 // pred_region
          _
        $region36: #{tpu_custom_call.1} parent=11 // pred_fallthru
          _
      $region12: #{tpu_custom_call.1} parent=5 // pred_fallthru
        _
      %p227 = scmp.lt.s32.totalorder %s16, 2
      // Predicated region
      $region37: #{tpu_custom_call.1} parent=5 // pred_check
        %p228 = pneg %p227
      $region38: #{tpu_custom_call.1} parent=5 // pred_check_branch
        %230 = sbr.rel (%p228) target = $region40
      $region39: #{tpu_custom_call.1} parent=5 // pred_region
        // Predicated region
        $region41: #{tpu_custom_call.1} parent=39 // pred_check
          %p231 = pneg %p36
        $region42: #{tpu_custom_call.1} parent=39 // pred_check_branch
          %233 = sbr.rel (%p231) target = $region44
        $region43: #{tpu_custom_call.1} parent=39 // pred_region
          %s234 = smul.u32 32, %s16
          %s235 = ssub.s32 63, %s234
          %p236 = scmp.lt.s32.totalorder %s235, 32
          %s237 = scalar_select %p236, %s235, 32
          %s238 = smul.u32 128, %s237
          %s239 = smul.u32 %s238, 7
          %p240 = scmp.lt.s32.totalorder %s234, 62
          %s241 = scalar_select %p240, %s234, 62
          %s242 = smul.addr %s241, 7
          %s243 = smul.addr %s242, 8
          %s244 = scalar_lea.vmem %s0, %s243
          %s245 = smul.u32 32, %s16
          %s246 = ssub.s32 63, %s245
          %p247 = scmp.lt.s32.totalorder %s246, 32
          %s248 = scalar_select %p247, %s246, 32
          %s249 = smul.u32 128, %s248
          %s250 = smul.u32 %s249, 7
        $region44: #{tpu_custom_call.1} parent=39 // pred_fallthru
          _
      $region40: #{tpu_custom_call.1} parent=5 // pred_fallthru
        _
      %p251 = scmp.le.s32.totalorder 1, %s16
      %p252 = scmp.lt.s32.totalorder %s16, 3
      %p253 = pnand %p251, %p252
      %p254 = pneg %p253
      // Predicated region
      $region45: #{tpu_custom_call.1} parent=5 // pred_check
        _
      $region46: #{tpu_custom_call.1} parent=5 // pred_check_branch
        %256 = sbr.rel (%p253) target = $region48
      $region47: #{tpu_custom_call.1} parent=5 // pred_region
        %s257 = ssub.s32 %s16, 1
        %s258 = smul.u32 32, %s21
        %s259 = ssub.s32 63, %s258
        %p260 = scmp.lt.s32.totalorder %s259, 32
        %s261 = scalar_select %p260, %s259, 32
        %s262 = smul.u32 128, %s261
        %s263 = smul.u32 %s262, 7
        %p264 = scmp.lt.s32.totalorder %s258, 62
        %s265 = scalar_select %p264, %s258, 62
        %s266 = smul.addr %s265, 7
        %s267 = smul.addr %s266, 8
        %s268 = scalar_lea.vmem %s0, %s267
        %p269 = pneg %p42
        %p270 = pneg %p39
        %p271 = pneg %p63
        %p272 = pneg %p60
        %p273 = pneg %p84
        %p274 = pneg %p81
        %p275 = pneg %p105
        %p276 = pneg %p102
        %p277 = pneg %p126
        %p278 = pneg %p123
        %p279 = pneg %p147
        %p280 = pneg %p144
        %p281 = pneg %p168
        %p282 = pneg %p165
        %p283 = pneg %p194
        %p284 = pneg %p191
        %s285 = sand.u32 %s181, 1
        %s286 = scalar_lea.sflag [#allocation3], %s285
        %s287 = sand.u32 %s181, 1
        %s288 = smul.addr %s287, 128
        %s289 = scalar_lea.vmem [#allocation2], %s288
        %s290 = smul.u32 32, %s21
        %s291 = ssub.s32 63, %s290
        %p292 = scmp.lt.s32.totalorder %s291, 32
        %s293 = scalar_select %p292, %s291, 32
        %s294 = smul.u32 128, %s293
        %s295 = smul.u32 %s294, 7
        %p296 = scmp.lt.s32.totalorder %s290, 62
        %s297 = scalar_select %p296, %s290, 62
        %s298 = smul.addr %s297, 7
        %s299 = smul.addr %s298, 8
        %s300 = scalar_lea.vmem %s0, %s299
        %s301 = smul.u32 32, %s21
        %s302 = ssub.s32 63, %s301
        %p303 = scmp.lt.s32.totalorder %s302, 32
        %s304 = scalar_select %p303, %s302, 32
        %s305 = smul.u32 128, %s304
        %s306 = smul.u32 %s305, 7
        %s307 = smul.u32 32, %s21
        %s308 = ssub.s32 63, %s307
        %p309 = scmp.lt.s32.totalorder %s308, 32
        %s310 = scalar_select %p309, %s308, 32
        %s311 = smul.u32 64, %s310
        %v313 = vld [vmem:[%s300] sm:$0xff]
        %v314 = vld [vmem:[%s300 + $0x8] sm:$0xff]
        %v315 = vld [vmem:[%s300 + $0x10] sm:$0xff]
        %v316 = vld [vmem:[%s300 + $0x18] sm:$0xff]
        %v317 = vld [vmem:[%s300 + $0x20] sm:$0xff]
        %v318 = vld [vmem:[%s300 + $0x28] sm:$0xff]
        %v319 = vld [vmem:[%s300 + $0x30] sm:$0xff]
        %v320 = vld [vmem:[%s300 + $0x38] sm:$0xff]
        %v321 = vld [vmem:[%s300 + $0x40] sm:$0xff]
        %v322 = vld [vmem:[%s300 + $0x48] sm:$0xff]
        %v323 = vld [vmem:[%s300 + $0x50] sm:$0xff]
        %v324 = vld [vmem:[%s300 + $0x58] sm:$0xff]
        %v325 = vld [vmem:[%s300 + $0x60] sm:$0xff]
        %v326 = vld [vmem:[%s300 + $0x68] sm:$0xff]
        %v327 = vld [vmem:[%s300 + $0x70] sm:$0xff]
        %v328 = vld [vmem:[%s300 + $0x78] sm:$0xff]
        %v329 = vld [vmem:[%s300 + $0x80] sm:$0xff]
        %v330 = vld [vmem:[%s300 + $0x88] sm:$0xff]
        %v331 = vld [vmem:[%s300 + $0x90] sm:$0xff]
        %v332 = vld [vmem:[%s300 + $0x98] sm:$0xff]
        %v333 = vld [vmem:[%s300 + $0xa0] sm:$0xff]
        %v334 = vld [vmem:[%s300 + $0xa8] sm:$0xff]
        %v335 = vld [vmem:[%s300 + $0xb0] sm:$0xff]
        %v336 = vld [vmem:[%s300 + $0xb8] sm:$0xff]
        %v337 = vld [vmem:[%s300 + $0xc0] sm:$0xff]
        %v338 = vld [vmem:[%s300 + $0xc8] sm:$0xff]
        %v339 = vld [vmem:[%s300 + $0xd0] sm:$0xff]
        %v340 = vld [vmem:[%s300 + $0xd8] sm:$0xff]
        %v341 = vld [vmem:[%s300 + $0xe0] sm:$0xff]
        %v342 = vld [vmem:[%s300 + $0xe8] sm:$0xff]
        %v343 = vld [vmem:[%s300 + $0xf0] sm:$0xff]
        %v344 = vld [vmem:[%s300 + $0xf8] sm:$0xff]
        %v345 = vld [vmem:[%s300 + $0x100] sm:$0xff]
        %v346 = vld [vmem:[%s300 + $0x108] sm:$0xff]
        %v347 = vld [vmem:[%s300 + $0x110] sm:$0xff]
        %v348 = vld [vmem:[%s300 + $0x118] sm:$0xff]
        %v349 = vld [vmem:[%s300 + $0x120] sm:$0xff]
        %v350 = vld [vmem:[%s300 + $0x128] sm:$0xff]
        %v351 = vld [vmem:[%s300 + $0x130] sm:$0xff]
        %v352 = vld [vmem:[%s300 + $0x138] sm:$0xff]
        %v353 = vld [vmem:[%s300 + $0x140] sm:$0xff]
        %v354 = vld [vmem:[%s300 + $0x148] sm:$0xff]
        %v355 = vld [vmem:[%s300 + $0x150] sm:$0xff]
        %v356 = vld [vmem:[%s300 + $0x158] sm:$0xff]
        %v357 = vld [vmem:[%s300 + $0x160] sm:$0xff]
        %v358 = vld [vmem:[%s300 + $0x168] sm:$0xff]
        %v359 = vld [vmem:[%s300 + $0x170] sm:$0xff]
        %v360 = vld [vmem:[%s300 + $0x178] sm:$0xff]
        %v361 = vld [vmem:[%s300 + $0x180] sm:$0xff]
        %v362 = vld [vmem:[%s300 + $0x188] sm:$0xff]
        %v363 = vld [vmem:[%s300 + $0x190] sm:$0xff]
        %v364 = vld [vmem:[%s300 + $0x198] sm:$0xff]
        %v365 = vld [vmem:[%s300 + $0x1a0] sm:$0xff]
        %v366 = vld [vmem:[%s300 + $0x1a8] sm:$0xff]
        %v367 = vld [vmem:[%s300 + $0x1b0] sm:$0xff]
        %v368 = vld [vmem:[%s300 + $0x1b8] sm:$0xff]
        %v369 = vld [vmem:[%s300 + $0x1c0] sm:$0xff]
        %v370 = vld [vmem:[%s300 + $0x1c8] sm:$0xff]
        %v371 = vld [vmem:[%s300 + $0x1d0] sm:$0xff]
        %v372 = vld [vmem:[%s300 + $0x1d8] sm:$0xff]
        %v373 = vld [vmem:[%s300 + $0x1e0] sm:$0xff]
        %v374 = vld [vmem:[%s300 + $0x1e8] sm:$0xff]
        %v375 = vld [vmem:[%s300 + $0x1f0] sm:$0xff]
        %v376 = vld [vmem:[%s300 + $0x1f8] sm:$0xff]
        %v377 = vld [vmem:[%s300 + $0x200] sm:$0xff]
        %v378 = vld [vmem:[%s300 + $0x208] sm:$0xff]
        %v379 = vld [vmem:[%s300 + $0x210] sm:$0xff]
        %v380 = vld [vmem:[%s300 + $0x218] sm:$0xff]
        %v381 = vld [vmem:[%s300 + $0x220] sm:$0xff]
        %v382 = vld [vmem:[%s300 + $0x228] sm:$0xff]
        %v383 = vld [vmem:[%s300 + $0x230] sm:$0xff]
        %v384 = vld [vmem:[%s300 + $0x238] sm:$0xff]
        %v385 = vld [vmem:[%s300 + $0x240] sm:$0xff]
        %v386 = vld [vmem:[%s300 + $0x248] sm:$0xff]
        %v387 = vld [vmem:[%s300 + $0x250] sm:$0xff]
        %v388 = vld [vmem:[%s300 + $0x258] sm:$0xff]
        %v389 = vld [vmem:[%s300 + $0x260] sm:$0xff]
        %v390 = vld [vmem:[%s300 + $0x268] sm:$0xff]
        %v391 = vld [vmem:[%s300 + $0x270] sm:$0xff]
        %v392 = vld [vmem:[%s300 + $0x278] sm:$0xff]
        %v393 = vld [vmem:[%s300 + $0x280] sm:$0xff]
        %v394 = vld [vmem:[%s300 + $0x288] sm:$0xff]
        %v395 = vld [vmem:[%s300 + $0x290] sm:$0xff]
        %v396 = vld [vmem:[%s300 + $0x298] sm:$0xff]
        %v397 = vld [vmem:[%s300 + $0x2a0] sm:$0xff]
        %v398 = vld [vmem:[%s300 + $0x2a8] sm:$0xff]
        %v399 = vld [vmem:[%s300 + $0x2b0] sm:$0xff]
        %v400 = vld [vmem:[%s300 + $0x2b8] sm:$0xff]
        %v401 = vld [vmem:[%s300 + $0x2c0] sm:$0xff]
        %v402 = vld [vmem:[%s300 + $0x2c8] sm:$0xff]
        %v403 = vld [vmem:[%s300 + $0x2d0] sm:$0xff]
        %v404 = vld [vmem:[%s300 + $0x2d8] sm:$0xff]
        %v405 = vld [vmem:[%s300 + $0x2e0] sm:$0xff]
        %v406 = vld [vmem:[%s300 + $0x2e8] sm:$0xff]
        %v407 = vld [vmem:[%s300 + $0x2f0] sm:$0xff]
        %v408 = vld [vmem:[%s300 + $0x2f8] sm:$0xff]
        %v409 = vld [vmem:[%s300 + $0x300] sm:$0xff]
        %v410 = vld [vmem:[%s300 + $0x308] sm:$0xff]
        %v411 = vld [vmem:[%s300 + $0x310] sm:$0xff]
        %v412 = vld [vmem:[%s300 + $0x318] sm:$0xff]
        %v413 = vld [vmem:[%s300 + $0x320] sm:$0xff]
        %v414 = vld [vmem:[%s300 + $0x328] sm:$0xff]
        %v415 = vld [vmem:[%s300 + $0x330] sm:$0xff]
        %v416 = vld [vmem:[%s300 + $0x338] sm:$0xff]
        %v417 = vld [vmem:[%s300 + $0x340] sm:$0xff]
        %v418 = vld [vmem:[%s300 + $0x348] sm:$0xff]
        %v419 = vld [vmem:[%s300 + $0x350] sm:$0xff]
        %v420 = vld [vmem:[%s300 + $0x358] sm:$0xff]
        %v421 = vld [vmem:[%s300 + $0x360] sm:$0xff]
        %v422 = vld [vmem:[%s300 + $0x368] sm:$0xff]
        %v423 = vld [vmem:[%s300 + $0x370] sm:$0xff]
        %v424 = vld [vmem:[%s300 + $0x378] sm:$0xff]
        %v425 = vld [vmem:[%s300 + $0x380] sm:$0xff]
        %v426 = vld [vmem:[%s300 + $0x388] sm:$0xff]
        %v427 = vld [vmem:[%s300 + $0x390] sm:$0xff]
        %v428 = vld [vmem:[%s300 + $0x398] sm:$0xff]
        %v429 = vld [vmem:[%s300 + $0x3a0] sm:$0xff]
        %v430 = vld [vmem:[%s300 + $0x3a8] sm:$0xff]
        %v431 = vld [vmem:[%s300 + $0x3b0] sm:$0xff]
        %v432 = vld [vmem:[%s300 + $0x3b8] sm:$0xff]
        %v433 = vld [vmem:[%s300 + $0x3c0] sm:$0xff]
        %v434 = vld [vmem:[%s300 + $0x3c8] sm:$0xff]
        %v435 = vld [vmem:[%s300 + $0x3d0] sm:$0xff]
        %v436 = vld [vmem:[%s300 + $0x3d8] sm:$0xff]
        %v437 = vld [vmem:[%s300 + $0x3e0] sm:$0xff]
        %v438 = vld [vmem:[%s300 + $0x3e8] sm:$0xff]
        %v439 = vld [vmem:[%s300 + $0x3f0] sm:$0xff]
        %v440 = vld [vmem:[%s300 + $0x3f8] sm:$0xff]
        %v441 = vld [vmem:[%s300 + $0x400] sm:$0xff]
        %v442 = vld [vmem:[%s300 + $0x408] sm:$0xff]
        %v443 = vld [vmem:[%s300 + $0x410] sm:$0xff]
        %v444 = vld [vmem:[%s300 + $0x418] sm:$0xff]
        %v445 = vld [vmem:[%s300 + $0x420] sm:$0xff]
        %v446 = vld [vmem:[%s300 + $0x428] sm:$0xff]
        %v447 = vld [vmem:[%s300 + $0x430] sm:$0xff]
        %v448 = vld [vmem:[%s300 + $0x438] sm:$0xff]
        %v449 = vld [vmem:[%s300 + $0x440] sm:$0xff]
        %v450 = vld [vmem:[%s300 + $0x448] sm:$0xff]
        %v451 = vld [vmem:[%s300 + $0x450] sm:$0xff]
        %v452 = vld [vmem:[%s300 + $0x458] sm:$0xff]
        %v453 = vld [vmem:[%s300 + $0x460] sm:$0xff]
        %v454 = vld [vmem:[%s300 + $0x468] sm:$0xff]
        %v455 = vld [vmem:[%s300 + $0x470] sm:$0xff]
        %v456 = vld [vmem:[%s300 + $0x478] sm:$0xff]
        %v457 = vld [vmem:[%s300 + $0x480] sm:$0xff]
        %v458 = vld [vmem:[%s300 + $0x488] sm:$0xff]
        %v459 = vld [vmem:[%s300 + $0x490] sm:$0xff]
        %v460 = vld [vmem:[%s300 + $0x498] sm:$0xff]
        %v461 = vld [vmem:[%s300 + $0x4a0] sm:$0xff]
        %v462 = vld [vmem:[%s300 + $0x4a8] sm:$0xff]
        %v463 = vld [vmem:[%s300 + $0x4b0] sm:$0xff]
        %v464 = vld [vmem:[%s300 + $0x4b8] sm:$0xff]
        %v465 = vld [vmem:[%s300 + $0x4c0] sm:$0xff]
        %v466 = vld [vmem:[%s300 + $0x4c8] sm:$0xff]
        %v467 = vld [vmem:[%s300 + $0x4d0] sm:$0xff]
        %v468 = vld [vmem:[%s300 + $0x4d8] sm:$0xff]
        %v469 = vld [vmem:[%s300 + $0x4e0] sm:$0xff]
        %v470 = vld [vmem:[%s300 + $0x4e8] sm:$0xff]
        %v471 = vld [vmem:[%s300 + $0x4f0] sm:$0xff]
        %v472 = vld [vmem:[%s300 + $0x4f8] sm:$0xff]
        %v473 = vld [vmem:[%s300 + $0x500] sm:$0xff]
        %v474 = vld [vmem:[%s300 + $0x508] sm:$0xff]
        %v475 = vld [vmem:[%s300 + $0x510] sm:$0xff]
        %v476 = vld [vmem:[%s300 + $0x518] sm:$0xff]
        %v477 = vld [vmem:[%s300 + $0x520] sm:$0xff]
        %v478 = vld [vmem:[%s300 + $0x528] sm:$0xff]
        %v479 = vld [vmem:[%s300 + $0x530] sm:$0xff]
        %v480 = vld [vmem:[%s300 + $0x538] sm:$0xff]
        %v481 = vld [vmem:[%s300 + $0x540] sm:$0xff]
        %v482 = vld [vmem:[%s300 + $0x548] sm:$0xff]
        %v483 = vld [vmem:[%s300 + $0x550] sm:$0xff]
        %v484 = vld [vmem:[%s300 + $0x558] sm:$0xff]
        %v485 = vld [vmem:[%s300 + $0x560] sm:$0xff]
        %v486 = vld [vmem:[%s300 + $0x568] sm:$0xff]
        %v487 = vld [vmem:[%s300 + $0x570] sm:$0xff]
        %v488 = vld [vmem:[%s300 + $0x578] sm:$0xff]
        %v489 = vld [vmem:[%s300 + $0x580] sm:$0xff]
        %v490 = vld [vmem:[%s300 + $0x588] sm:$0xff]
        %v491 = vld [vmem:[%s300 + $0x590] sm:$0xff]
        %v492 = vld [vmem:[%s300 + $0x598] sm:$0xff]
        %v493 = vld [vmem:[%s300 + $0x5a0] sm:$0xff]
        %v494 = vld [vmem:[%s300 + $0x5a8] sm:$0xff]
        %v495 = vld [vmem:[%s300 + $0x5b0] sm:$0xff]
        %v496 = vld [vmem:[%s300 + $0x5b8] sm:$0xff]
        %v497 = vld [vmem:[%s300 + $0x5c0] sm:$0xff]
        %v498 = vld [vmem:[%s300 + $0x5c8] sm:$0xff]
        %v499 = vld [vmem:[%s300 + $0x5d0] sm:$0xff]
        %v500 = vld [vmem:[%s300 + $0x5d8] sm:$0xff]
        %v501 = vld [vmem:[%s300 + $0x5e0] sm:$0xff]
        %v502 = vld [vmem:[%s300 + $0x5e8] sm:$0xff]
        %v503 = vld [vmem:[%s300 + $0x5f0] sm:$0xff]
        %v504 = vld [vmem:[%s300 + $0x5f8] sm:$0xff]
        %v505 = vld [vmem:[%s300 + $0x600] sm:$0xff]
        %v506 = vld [vmem:[%s300 + $0x608] sm:$0xff]
        %v507 = vld [vmem:[%s300 + $0x610] sm:$0xff]
        %v508 = vld [vmem:[%s300 + $0x618] sm:$0xff]
        %v509 = vld [vmem:[%s300 + $0x620] sm:$0xff]
        %v510 = vld [vmem:[%s300 + $0x628] sm:$0xff]
        %v511 = vld [vmem:[%s300 + $0x630] sm:$0xff]
        %v512 = vld [vmem:[%s300 + $0x638] sm:$0xff]
        %v513 = vld [vmem:[%s300 + $0x640] sm:$0xff]
        %v514 = vld [vmem:[%s300 + $0x648] sm:$0xff]
        %v515 = vld [vmem:[%s300 + $0x650] sm:$0xff]
        %v516 = vld [vmem:[%s300 + $0x658] sm:$0xff]
        %v517 = vld [vmem:[%s300 + $0x660] sm:$0xff]
        %v518 = vld [vmem:[%s300 + $0x668] sm:$0xff]
        %v519 = vld [vmem:[%s300 + $0x670] sm:$0xff]
        %v520 = vld [vmem:[%s300 + $0x678] sm:$0xff]
        %v521 = vld [vmem:[%s300 + $0x680] sm:$0xff]
        %v522 = vld [vmem:[%s300 + $0x688] sm:$0xff]
        %v523 = vld [vmem:[%s300 + $0x690] sm:$0xff]
        %v524 = vld [vmem:[%s300 + $0x698] sm:$0xff]
        %v525 = vld [vmem:[%s300 + $0x6a0] sm:$0xff]
        %v526 = vld [vmem:[%s300 + $0x6a8] sm:$0xff]
        %v527 = vld [vmem:[%s300 + $0x6b0] sm:$0xff]
        %v528 = vld [vmem:[%s300 + $0x6b8] sm:$0xff]
        %v529 = vld [vmem:[%s300 + $0x6c0] sm:$0xff]
        %v530 = vld [vmem:[%s300 + $0x6c8] sm:$0xff]
        %v531 = vld [vmem:[%s300 + $0x6d0] sm:$0xff]
        %v532 = vld [vmem:[%s300 + $0x6d8] sm:$0xff]
        %v533 = vld [vmem:[%s300 + $0x6e0] sm:$0xff]
        %v534 = vld [vmem:[%s300 + $0x6e8] sm:$0xff]
        %v535 = vld [vmem:[%s300 + $0x6f0] sm:$0xff]
        %v536 = vld [vmem:[%s300 + $0x6f8] sm:$0xff]
        %v537 = vpack.c.bf16 %v320, %v313
        %v538 = vpack.c.bf16 %v321, %v314
        %v539 = vpack.c.bf16 %v322, %v315
        %v540 = vpack.c.bf16 %v323, %v316
        %v541 = vpack.c.bf16 %v324, %v317
        %v542 = vpack.c.bf16 %v325, %v318
        %v543 = vpack.c.bf16 %v326, %v319
        %v544 = vpack.c.bf16 %v334, %v327
        %v545 = vpack.c.bf16 %v335, %v328
        %v546 = vpack.c.bf16 %v336, %v329
        %v547 = vpack.c.bf16 %v337, %v330
        %v548 = vpack.c.bf16 %v338, %v331
        %v549 = vpack.c.bf16 %v339, %v332
        %v550 = vpack.c.bf16 %v340, %v333
        %v551 = vpack.c.bf16 %v348, %v341
        %v552 = vpack.c.bf16 %v349, %v342
        %v553 = vpack.c.bf16 %v350, %v343
        %v554 = vpack.c.bf16 %v351, %v344
        %v555 = vpack.c.bf16 %v352, %v345
        %v556 = vpack.c.bf16 %v353, %v346
        %v557 = vpack.c.bf16 %v354, %v347
        %v558 = vpack.c.bf16 %v362, %v355
        %v559 = vpack.c.bf16 %v363, %v356
        %v560 = vpack.c.bf16 %v364, %v357
        %v561 = vpack.c.bf16 %v365, %v358
        %v562 = vpack.c.bf16 %v366, %v359
        %v563 = vpack.c.bf16 %v367, %v360
        %v564 = vpack.c.bf16 %v368, %v361
        %v565 = vpack.c.bf16 %v376, %v369
        %v566 = vpack.c.bf16 %v377, %v370
        %v567 = vpack.c.bf16 %v378, %v371
        %v568 = vpack.c.bf16 %v379, %v372
        %v569 = vpack.c.bf16 %v380, %v373
        %v570 = vpack.c.bf16 %v381, %v374
        %v571 = vpack.c.bf16 %v382, %v375
        %v572 = vpack.c.bf16 %v390, %v383
        %v573 = vpack.c.bf16 %v391, %v384
        %v574 = vpack.c.bf16 %v392, %v385
        %v575 = vpack.c.bf16 %v393, %v386
        %v576 = vpack.c.bf16 %v394, %v387
        %v577 = vpack.c.bf16 %v395, %v388
        %v578 = vpack.c.bf16 %v396, %v389
        %v579 = vpack.c.bf16 %v404, %v397
        %v580 = vpack.c.bf16 %v405, %v398
        %v581 = vpack.c.bf16 %v406, %v399
        %v582 = vpack.c.bf16 %v407, %v400
        %v583 = vpack.c.bf16 %v408, %v401
        %v584 = vpack.c.bf16 %v409, %v402
        %v585 = vpack.c.bf16 %v410, %v403
        %v586 = vpack.c.bf16 %v418, %v411
        %v587 = vpack.c.bf16 %v419, %v412
        %v588 = vpack.c.bf16 %v420, %v413
        %v589 = vpack.c.bf16 %v421, %v414
        %v590 = vpack.c.bf16 %v422, %v415
        %v591 = vpack.c.bf16 %v423, %v416
        %v592 = vpack.c.bf16 %v424, %v417
        %v593 = vpack.c.bf16 %v432, %v425
        %v594 = vpack.c.bf16 %v433, %v426
        %v595 = vpack.c.bf16 %v434, %v427
        %v596 = vpack.c.bf16 %v435, %v428
        %v597 = vpack.c.bf16 %v436, %v429
        %v598 = vpack.c.bf16 %v437, %v430
        %v599 = vpack.c.bf16 %v438, %v431
        %v600 = vpack.c.bf16 %v446, %v439
        %v601 = vpack.c.bf16 %v447, %v440
        %v602 = vpack.c.bf16 %v448, %v441
        %v603 = vpack.c.bf16 %v449, %v442
        %v604 = vpack.c.bf16 %v450, %v443
        %v605 = vpack.c.bf16 %v451, %v444
        %v606 = vpack.c.bf16 %v452, %v445
        %v607 = vpack.c.bf16 %v460, %v453
        %v608 = vpack.c.bf16 %v461, %v454
        %v609 = vpack.c.bf16 %v462, %v455
        %v610 = vpack.c.bf16 %v463, %v456
        %v611 = vpack.c.bf16 %v464, %v457
        %v612 = vpack.c.bf16 %v465, %v458
        %v613 = vpack.c.bf16 %v466, %v459
        %v614 = vpack.c.bf16 %v474, %v467
        %v615 = vpack.c.bf16 %v475, %v468
        %v616 = vpack.c.bf16 %v476, %v469
        %v617 = vpack.c.bf16 %v477, %v470
        %v618 = vpack.c.bf16 %v478, %v471
        %v619 = vpack.c.bf16 %v479, %v472
        %v620 = vpack.c.bf16 %v480, %v473
        %v621 = vpack.c.bf16 %v488, %v481
        %v622 = vpack.c.bf16 %v489, %v482
        %v623 = vpack.c.bf16 %v490, %v483
        %v624 = vpack.c.bf16 %v491, %v484
        %v625 = vpack.c.bf16 %v492, %v485
        %v626 = vpack.c.bf16 %v493, %v486
        %v627 = vpack.c.bf16 %v494, %v487
        %v628 = vpack.c.bf16 %v502, %v495
        %v629 = vpack.c.bf16 %v503, %v496
        %v630 = vpack.c.bf16 %v504, %v497
        %v631 = vpack.c.bf16 %v505, %v498
        %v632 = vpack.c.bf16 %v506, %v499
        %v633 = vpack.c.bf16 %v507, %v500
        %v634 = vpack.c.bf16 %v508, %v501
        %v635 = vpack.c.bf16 %v516, %v509
        %v636 = vpack.c.bf16 %v517, %v510
        %v637 = vpack.c.bf16 %v518, %v511
        %v638 = vpack.c.bf16 %v519, %v512
        %v639 = vpack.c.bf16 %v520, %v513
        %v640 = vpack.c.bf16 %v521, %v514
        %v641 = vpack.c.bf16 %v522, %v515
        %v642 = vpack.c.bf16 %v530, %v523
        %v643 = vpack.c.bf16 %v531, %v524
        %v644 = vpack.c.bf16 %v532, %v525
        %v645 = vpack.c.bf16 %v533, %v526
        %v646 = vpack.c.bf16 %v534, %v527
        %v647 = vpack.c.bf16 %v535, %v528
        %v648 = vpack.c.bf16 %v536, %v529
        %v649 = vld [vmem:[%s1] sm:$0xf]
        %v650 = vld [vmem:[%s1 + $0x4] sm:$0xf]
        %v651 = vld [vmem:[%s1 + $0x8] sm:$0xf]
        %v652 = vld [vmem:[%s1 + $0xc] sm:$0xf]
        %v653 = vld [vmem:[%s1 + $0x10] sm:$0xf]
        %v654 = vld [vmem:[%s1 + $0x14] sm:$0xf]
        %v655 = vld [vmem:[%s1 + $0x18] sm:$0xf]
        %v656 = vld [vmem:[%s1 + $0x1c] sm:$0xf]
        %v657 = vld [vmem:[%s1 + $0x20] sm:$0xf]
        %v658 = vld [vmem:[%s1 + $0x24] sm:$0xf]
        %v659 = vld [vmem:[%s1 + $0x28] sm:$0xf]
        %v660 = vld [vmem:[%s1 + $0x2c] sm:$0xf]
        %v661 = vld [vmem:[%s1 + $0x30] sm:$0xf]
        %v662 = vld [vmem:[%s1 + $0x34] sm:$0xf]
        %v663 = vld [vmem:[%s1 + $0x38] sm:$0xf]
        %v664 = vld [vmem:[%s1 + $0x3c] sm:$0xf]
        %v665 = vld [vmem:[%s1 + $0x40] sm:$0xf]
        %v666 = vld [vmem:[%s1 + $0x44] sm:$0xf]
        %v667 = vld [vmem:[%s1 + $0x48] sm:$0xf]
        %v668 = vld [vmem:[%s1 + $0x4c] sm:$0xf]
        %v669 = vld [vmem:[%s1 + $0x50] sm:$0xf]
        %v670 = vld [vmem:[%s1 + $0x54] sm:$0xf]
        %v671 = vld [vmem:[%s1 + $0x58] sm:$0xf]
        %v672 = vld [vmem:[%s1 + $0x5c] sm:$0xf]
        %v673 = vld [vmem:[%s1 + $0x60] sm:$0xf]
        %v674 = vld [vmem:[%s1 + $0x64] sm:$0xf]
        %v675 = vld [vmem:[%s1 + $0x68] sm:$0xf]
        %v676 = vld [vmem:[%s1 + $0x6c] sm:$0xf]
        %v677 = vld [vmem:[%s1 + $0x70] sm:$0xf]
        %v678 = vld [vmem:[%s1 + $0x74] sm:$0xf]
        %v679 = vld [vmem:[%s1 + $0x78] sm:$0xf]
        %v680 = vld [vmem:[%s1 + $0x7c] sm:$0xf]
        %v681 = vld [vmem:[%s1 + $0x80] sm:$0xf]
        %v682 = vld [vmem:[%s1 + $0x84] sm:$0xf]
        %v683 = vld [vmem:[%s1 + $0x88] sm:$0xf]
        %v684 = vld [vmem:[%s1 + $0x8c] sm:$0xf]
        %v685 = vld [vmem:[%s1 + $0x90] sm:$0xf]
        %v686 = vld [vmem:[%s1 + $0x94] sm:$0xf]
        %v687 = vld [vmem:[%s1 + $0x98] sm:$0xf]
        %v688 = vld [vmem:[%s1 + $0x9c] sm:$0xf]
        %v689 = vld [vmem:[%s1 + $0xa0] sm:$0xf]
        %v690 = vld [vmem:[%s1 + $0xa4] sm:$0xf]
        %v691 = vld [vmem:[%s1 + $0xa8] sm:$0xf]
        %v692 = vld [vmem:[%s1 + $0xac] sm:$0xf]
        %v693 = vld [vmem:[%s1 + $0xb0] sm:$0xf]
        %v694 = vld [vmem:[%s1 + $0xb4] sm:$0xf]
        %v695 = vld [vmem:[%s1 + $0xb8] sm:$0xf]
        %v696 = vld [vmem:[%s1 + $0xbc] sm:$0xf]
        %v697 = vld [vmem:[%s1 + $0xc0] sm:$0xf]
        %v698 = vld [vmem:[%s1 + $0xc4] sm:$0xf]
        %v699 = vld [vmem:[%s1 + $0xc8] sm:$0xf]
        %v700 = vld [vmem:[%s1 + $0xcc] sm:$0xf]
        %v701 = vld [vmem:[%s1 + $0xd0] sm:$0xf]
        %v702 = vld [vmem:[%s1 + $0xd4] sm:$0xf]
        %v703 = vld [vmem:[%s1 + $0xd8] sm:$0xf]
        %v704 = vld [vmem:[%s1 + $0xdc] sm:$0xf]
        %v705 = vld [vmem:[%s1 + $0xe0] sm:$0xf]
        %v706 = vld [vmem:[%s1 + $0xe4] sm:$0xf]
        %v707 = vld [vmem:[%s1 + $0xe8] sm:$0xf]
        %v708 = vld [vmem:[%s1 + $0xec] sm:$0xf]
        %v709 = vld [vmem:[%s1 + $0xf0] sm:$0xf]
        %v710 = vld [vmem:[%s1 + $0xf4] sm:$0xf]
        %v711 = vld [vmem:[%s1 + $0xf8] sm:$0xf]
        %v712 = vld [vmem:[%s1 + $0xfc] sm:$0xf]
        %v713 = vld [vmem:[%s1 + $0x100] sm:$0xf]
        %v714 = vld [vmem:[%s1 + $0x104] sm:$0xf]
        %v715 = vld [vmem:[%s1 + $0x108] sm:$0xf]
        %v716 = vld [vmem:[%s1 + $0x10c] sm:$0xf]
        %v717 = vld [vmem:[%s1 + $0x110] sm:$0xf]
        %v718 = vld [vmem:[%s1 + $0x114] sm:$0xf]
        %v719 = vld [vmem:[%s1 + $0x118] sm:$0xf]
        %v720 = vld [vmem:[%s1 + $0x11c] sm:$0xf]
        %v721 = vld [vmem:[%s1 + $0x120] sm:$0xf]
        %v722 = vld [vmem:[%s1 + $0x124] sm:$0xf]
        %v723 = vld [vmem:[%s1 + $0x128] sm:$0xf]
        %v724 = vld [vmem:[%s1 + $0x12c] sm:$0xf]
        %v725 = vld [vmem:[%s1 + $0x130] sm:$0xf]
        %v726 = vld [vmem:[%s1 + $0x134] sm:$0xf]
        %v727 = vld [vmem:[%s1 + $0x138] sm:$0xf]
        %v728 = vld [vmem:[%s1 + $0x13c] sm:$0xf]
        %v729 = vld [vmem:[%s1 + $0x140] sm:$0xf]
        %v730 = vld [vmem:[%s1 + $0x144] sm:$0xf]
        %v731 = vld [vmem:[%s1 + $0x148] sm:$0xf]
        %v732 = vld [vmem:[%s1 + $0x14c] sm:$0xf]
        %v733 = vld [vmem:[%s1 + $0x150] sm:$0xf]
        %v734 = vld [vmem:[%s1 + $0x154] sm:$0xf]
        %v735 = vld [vmem:[%s1 + $0x158] sm:$0xf]
        %v736 = vld [vmem:[%s1 + $0x15c] sm:$0xf]
        %v737 = vld [vmem:[%s1 + $0x160] sm:$0xf]
        %v738 = vld [vmem:[%s1 + $0x164] sm:$0xf]
        %v739 = vld [vmem:[%s1 + $0x168] sm:$0xf]
        %v740 = vld [vmem:[%s1 + $0x16c] sm:$0xf]
        %v741 = vld [vmem:[%s1 + $0x170] sm:$0xf]
        %v742 = vld [vmem:[%s1 + $0x174] sm:$0xf]
        %v743 = vld [vmem:[%s1 + $0x178] sm:$0xf]
        %v744 = vld [vmem:[%s1 + $0x17c] sm:$0xf]
        %v745 = vld [vmem:[%s1 + $0x180] sm:$0xf]
        %v746 = vld [vmem:[%s1 + $0x184] sm:$0xf]
        %v747 = vld [vmem:[%s2] sm:$0x1]
        %v749 = vlaneseq
        %v750 = vshrl.u32 %v749, 7
        %v751 = vsub.s32 0, %v750
        %v752 = vrot.slane %v747, %v751
        %v852 = vunpack.c.l.b16 %v649
        %v853 = vunpack.c.l.b16 %v650
        %v854 = vunpack.c.l.b16 %v651
        %v855 = vunpack.c.l.b16 %v652
        %v856 = vunpack.c.l.b16 %v653
        %v857 = vunpack.c.l.b16 %v654
        %v858 = vunpack.c.l.b16 %v655
        %v859 = vunpack.c.l.b16 %v656
        %v860 = vunpack.c.l.b16 %v657
        %v861 = vunpack.c.l.b16 %v658
        %v862 = vunpack.c.l.b16 %v659
        %v863 = vunpack.c.l.b16 %v660
        %v864 = vunpack.c.l.b16 %v661
        %v865 = vunpack.c.l.b16 %v662
        %v866 = vunpack.c.l.b16 %v663
        %v867 = vunpack.c.l.b16 %v664
        %v868 = vunpack.c.l.b16 %v665
        %v869 = vunpack.c.l.b16 %v666
        %v870 = vunpack.c.l.b16 %v667
        %v871 = vunpack.c.l.b16 %v668
        %v872 = vunpack.c.l.b16 %v669
        %v873 = vunpack.c.l.b16 %v670
        %v874 = vunpack.c.l.b16 %v671
        %v875 = vunpack.c.l.b16 %v672
        %v876 = vunpack.c.l.b16 %v673
        %v877 = vunpack.c.l.b16 %v674
        %v878 = vunpack.c.l.b16 %v675
        %v879 = vunpack.c.l.b16 %v676
        %v880 = vunpack.c.l.b16 %v677
        %v881 = vunpack.c.l.b16 %v678
        %v882 = vunpack.c.l.b16 %v679
        %v883 = vunpack.c.l.b16 %v680
        %v884 = vunpack.c.l.b16 %v681
        %v885 = vunpack.c.l.b16 %v682
        %v886 = vunpack.c.l.b16 %v683
        %v887 = vunpack.c.l.b16 %v684
        %v888 = vunpack.c.l.b16 %v685
        %v889 = vunpack.c.l.b16 %v686
        %v890 = vunpack.c.l.b16 %v687
        %v891 = vunpack.c.l.b16 %v688
        %v892 = vunpack.c.l.b16 %v689
        %v893 = vunpack.c.l.b16 %v690
        %v894 = vunpack.c.l.b16 %v691
        %v895 = vunpack.c.l.b16 %v692
        %v896 = vunpack.c.l.b16 %v693
        %v897 = vunpack.c.l.b16 %v694
        %v898 = vunpack.c.l.b16 %v695
        %v899 = vunpack.c.l.b16 %v696
        %v900 = vunpack.c.l.b16 %v697
        %v901 = vunpack.c.l.b16 %v698
        %v902 = vunpack.c.l.b16 %v699
        %v903 = vunpack.c.l.b16 %v700
        %v904 = vunpack.c.l.b16 %v701
        %v905 = vunpack.c.l.b16 %v702
        %v906 = vunpack.c.l.b16 %v703
        %v907 = vunpack.c.l.b16 %v704
        %v908 = vunpack.c.l.b16 %v705
        %v909 = vunpack.c.l.b16 %v706
        %v910 = vunpack.c.l.b16 %v707
        %v911 = vunpack.c.l.b16 %v708
        %v912 = vunpack.c.l.b16 %v709
        %v913 = vunpack.c.l.b16 %v710
        %v914 = vunpack.c.l.b16 %v711
        %v915 = vunpack.c.l.b16 %v712
        %v916 = vunpack.c.l.b16 %v713
        %v917 = vunpack.c.l.b16 %v714
        %v918 = vunpack.c.l.b16 %v715
        %v919 = vunpack.c.l.b16 %v716
        %v920 = vunpack.c.l.b16 %v717
        %v921 = vunpack.c.l.b16 %v718
        %v922 = vunpack.c.l.b16 %v719
        %v923 = vunpack.c.l.b16 %v720
        %v924 = vunpack.c.l.b16 %v721
        %v925 = vunpack.c.l.b16 %v722
        %v926 = vunpack.c.l.b16 %v723
        %v927 = vunpack.c.l.b16 %v724
        %v928 = vunpack.c.l.b16 %v725
        %v929 = vunpack.c.l.b16 %v726
        %v930 = vunpack.c.l.b16 %v727
        %v931 = vunpack.c.l.b16 %v728
        %v932 = vunpack.c.l.b16 %v729
        %v933 = vunpack.c.l.b16 %v730
        %v934 = vunpack.c.l.b16 %v731
        %v935 = vunpack.c.l.b16 %v732
        %v936 = vunpack.c.l.b16 %v733
        %v937 = vunpack.c.l.b16 %v734
        %v938 = vunpack.c.l.b16 %v735
        %v939 = vunpack.c.l.b16 %v736
        %v940 = vunpack.c.l.b16 %v737
        %v941 = vunpack.c.l.b16 %v738
        %v942 = vunpack.c.l.b16 %v739
        %v943 = vunpack.c.l.b16 %v740
        %v944 = vunpack.c.l.b16 %v741
        %v945 = vunpack.c.l.b16 %v742
        %v946 = vunpack.c.l.b16 %v743
        %v947 = vunpack.c.l.b16 %v744
        %v948 = vunpack.c.l.b16 %v745
        %v949 = vunpack.c.l.b16 %v746
        %v950 = vpack.c.b16 %v853, %v852
        %v951 = vpack.c.b16 %v855, %v854
        %v952 = vpack.c.b16 %v857, %v856
        %v953 = vpack.c.b16 %v859, %v858
        %v954 = vpack.c.b16 %v861, %v860
        %v955 = vpack.c.b16 %v863, %v862
        %v956 = vpack.c.b16 %v865, %v864
        %v957 = vpack.c.b16 %v867, %v866
        %v958 = vpack.c.b16 %v869, %v868
        %v959 = vpack.c.b16 %v871, %v870
        %v960 = vpack.c.b16 %v873, %v872
        %v961 = vpack.c.b16 %v875, %v874
        %v962 = vpack.c.b16 %v877, %v876
        %v963 = vpack.c.b16 %v879, %v878
        %v964 = vpack.c.b16 %v881, %v880
        %v965 = vpack.c.b16 %v883, %v882
        %v966 = vpack.c.b16 %v885, %v884
        %v967 = vpack.c.b16 %v887, %v886
        %v968 = vpack.c.b16 %v889, %v888
        %v969 = vpack.c.b16 %v891, %v890
        %v970 = vpack.c.b16 %v893, %v892
        %v971 = vpack.c.b16 %v895, %v894
        %v972 = vpack.c.b16 %v897, %v896
        %v973 = vpack.c.b16 %v899, %v898
        %v974 = vpack.c.b16 %v901, %v900
        %v975 = vpack.c.b16 %v903, %v902
        %v976 = vpack.c.b16 %v905, %v904
        %v977 = vpack.c.b16 %v907, %v906
        %v978 = vpack.c.b16 %v909, %v908
        %v979 = vpack.c.b16 %v911, %v910
        %v980 = vpack.c.b16 %v913, %v912
        %v981 = vpack.c.b16 %v915, %v914
        %v982 = vpack.c.b16 %v917, %v916
        %v983 = vpack.c.b16 %v919, %v918
        %v984 = vpack.c.b16 %v921, %v920
        %v985 = vpack.c.b16 %v923, %v922
        %v986 = vpack.c.b16 %v925, %v924
        %v987 = vpack.c.b16 %v927, %v926
        %v988 = vpack.c.b16 %v929, %v928
        %v989 = vpack.c.b16 %v931, %v930
        %v990 = vpack.c.b16 %v933, %v932
        %v991 = vpack.c.b16 %v935, %v934
        %v992 = vpack.c.b16 %v937, %v936
        %v993 = vpack.c.b16 %v939, %v938
        %v994 = vpack.c.b16 %v941, %v940
        %v995 = vpack.c.b16 %v943, %v942
        %v996 = vpack.c.b16 %v945, %v944
        %v997 = vpack.c.b16 %v947, %v946
        %v998 = vpack.c.b16 %v949, %v948
        %vm1048 = vcmask 130048
        %v1050 = vsel %vm1048, %v543, 0
        %v1053 = vsel %vm1048, %v550, 0
        %v1056 = vsel %vm1048, %v557, 0
        %v1059 = vsel %vm1048, %v564, 0
        %v1062 = vsel %vm1048, %v571, 0
        %v1065 = vsel %vm1048, %v578, 0
        %v1068 = vsel %vm1048, %v585, 0
        %v1071 = vsel %vm1048, %v592, 0
        %v1074 = vsel %vm1048, %v599, 0
        %v1077 = vsel %vm1048, %v606, 0
        %v1080 = vsel %vm1048, %v613, 0
        %v1083 = vsel %vm1048, %v620, 0
        %v1086 = vsel %vm1048, %v627, 0
        %v1089 = vsel %vm1048, %v634, 0
        %v1092 = vsel %vm1048, %v641, 0
        %v1095 = vsel %vm1048, %v648, 0
        %1097 = vmatprep.subr.bf16.mxu0 0
        %1098 = vmatpush1.bf16.msra.mxu0 %v950
        %1099 = vmatprep.subr.bf16.mxu0 0
        %1100 = vmatpush1.bf16.msra.mxu0 %v951
        %1101 = vmatprep.subr.bf16.mxu0 0
        %1102 = vmatpush1.bf16.msra.mxu0 %v952
        %1103 = vmatprep.subr.bf16.mxu0 0
        %1104 = vmatpush1.bf16.msra.mxu0 %v953
        %1105 = vmatprep.subr.bf16.mxu0 0
        %1106 = vmatpush1.bf16.msra.mxu0 %v954
        %1107 = vmatprep.subr.bf16.mxu0 0
        %1108 = vmatpush1.bf16.msra.mxu0 %v955
        %1109 = vmatprep.subr.bf16.mxu0 0
        %1110 = vmatpush1.bf16.msra.mxu0 %v956
        %1111 = vmatprep.subr.bf16.mxu0 0
        %1112 = vmatpush1.bf16.msra.mxu0 %v957
        %1113 = vmatprep.subr.bf16.mxu0 0
        %1114 = vmatpush1.bf16.msra.mxu0 %v958
        %1115 = vmatprep.subr.bf16.mxu0 0
        %1116 = vmatpush1.bf16.msra.mxu0 %v959
        %1117 = vmatprep.subr.bf16.mxu0 0
        %1118 = vmatpush1.bf16.msra.mxu0 %v960
        %1119 = vmatprep.subr.bf16.mxu0 0
        %1120 = vmatpush1.bf16.msra.mxu0 %v961
        %1121 = vmatprep.subr.bf16.mxu0 0
        %1122 = vmatpush1.bf16.msra.mxu0 %v962
        %1123 = vmatprep.subr.bf16.mxu0 0
        %1124 = vmatpush1.bf16.msra.mxu0 %v963
        %1125 = vmatprep.subr.bf16.mxu0 0
        %1126 = vmatpush1.bf16.msra.mxu0 %v964
        %1127 = vmatprep.subr.bf16.mxu0 0
        %1128 = vmatpush1.bf16.msra.mxu0 %v965
        %1129 = vmatprep.mubr.bf16.mxu0 %v538
        %1130 = vmatmul.mubr.bf16.gmra.mrb[0].mxu0 %v537
        %v1131 = vpop.f32.mrb[0].mxu0
        %v1132 = vadd.f32 %v752, %v1131
        %v1133 = vpop.f32.mrb[0].mxu0
        %v1134 = vpop.f32.mrb[0].mxu0
        %v1135 = vadd.f32 %v752, %v1134
        %v1136 = vpop.f32.mrb[0].mxu0
        %1137 = vmatprep.mubr.bf16.mxu0 %v545
        %1138 = vmatmul.mubr.bf16.gmra.mrb[0].mxu0 %v544
        %v1139 = vpop.f32.mrb[0].mxu0
        %v1140 = vadd.f32 %v752, %v1139
        %v1141 = vpop.f32.mrb[0].mxu0
        %v1142 = vpop.f32.mrb[0].mxu0
        %v1143 = vadd.f32 %v752, %v1142
        %v1144 = vpop.f32.mrb[0].mxu0
        %1145 = vmatprep.mubr.bf16.mxu0 %v552
        %1146 = vmatmul.mubr.bf16.gmra.mrb[0].mxu0 %v551
        %v1147 = vpop.f32.mrb[0].mxu0
        %v1148 = vadd.f32 %v752, %v1147
        %v1149 = vpop.f32.mrb[0].mxu0
        %v1150 = vpop.f32.mrb[0].mxu0
        %v1151 = vadd.f32 %v752, %v1150
        %v1152 = vpop.f32.mrb[0].mxu0
        %1153 = vmatprep.mubr.bf16.mxu0 %v559
        %1154 = vmatmul.mubr.bf16.gmra.mrb[0].mxu0 %v558
        %v1155 = vpop.f32.mrb[0].mxu0
        %v1156 = vadd.f32 %v752, %v1155
        %v1157 = vpop.f32.mrb[0].mxu0
        %v1158 = vpop.f32.mrb[0].mxu0
        %v1159 = vadd.f32 %v752, %v1158
        %v1160 = vpop.f32.mrb[0].mxu0
        %1161 = vmatprep.mubr.bf16.mxu0 %v566
        %1162 = vmatmul.mubr.bf16.gmra.mrb[0].mxu0 %v565
        %v1163 = vpop.f32.mrb[0].mxu0
        %v1164 = vadd.f32 %v752, %v1163
        %v1165 = vpop.f32.mrb[0].mxu0
        %v1166 = vpop.f32.mrb[0].mxu0
        %v1167 = vadd.f32 %v752, %v1166
        %v1168 = vpop.f32.mrb[0].mxu0
        %1169 = vmatprep.mubr.bf16.mxu0 %v573
        %1170 = vmatmul.mubr.bf16.gmra.mrb[0].mxu0 %v572
        %v1171 = vpop.f32.mrb[0].mxu0
        %v1172 = vadd.f32 %v752, %v1171
        %v1173 = vpop.f32.mrb[0].mxu0
        %v1174 = vpop.f32.mrb[0].mxu0
        %v1175 = vadd.f32 %v752, %v1174
        %v1176 = vpop.f32.mrb[0].mxu0
        %1177 = vmatprep.mubr.bf16.mxu0 %v580
        %1178 = vmatmul.mubr.bf16.gmra.mrb[0].mxu0 %v579
        %v1179 = vpop.f32.mrb[0].mxu0
        %v1180 = vadd.f32 %v752, %v1179
        %v1181 = vpop.f32.mrb[0].mxu0
        %v1182 = vpop.f32.mrb[0].mxu0
        %v1183 = vadd.f32 %v752, %v1182
        %v1184 = vpop.f32.mrb[0].mxu0
        %1185 = vmatprep.mubr.bf16.mxu0 %v587
        %1186 = vmatmul.mubr.bf16.gmra.mrb[0].mxu0 %v586
        %v1187 = vpop.f32.mrb[0].mxu0
        %v1188 = vadd.f32 %v752, %v1187
        %v1189 = vpop.f32.mrb[0].mxu0
        %v1190 = vpop.f32.mrb[0].mxu0
        %v1191 = vadd.f32 %v752, %v1190
        %v1192 = vpop.f32.mrb[0].mxu0
        %1193 = vmatprep.mubr.bf16.mxu0 %v594
        %1194 = vmatmul.mubr.bf16.gmra.mrb[0].mxu0 %v593
        %v1195 = vpop.f32.mrb[0].mxu0
        %v1196 = vadd.f32 %v752, %v1195
        %v1197 = vpop.f32.mrb[0].mxu0
        %v1198 = vpop.f32.mrb[0].mxu0
        %v1199 = vadd.f32 %v752, %v1198
        %v1200 = vpop.f32.mrb[0].mxu0
        %1201 = vmatprep.mubr.bf16.mxu0 %v601
        %1202 = vmatmul.mubr.bf16.gmra.mrb[0].mxu0 %v600
        %v1203 = vpop.f32.mrb[0].mxu0
        %v1204 = vadd.f32 %v752, %v1203
        %v1205 = vpop.f32.mrb[0].mxu0
        %v1206 = vpop.f32.mrb[0].mxu0
        %v1207 = vadd.f32 %v752, %v1206
        %v1208 = vpop.f32.mrb[0].mxu0
        %1209 = vmatprep.mubr.bf16.mxu0 %v608
        %1210 = vmatmul.mubr.bf16.gmra.mrb[0].mxu0 %v607
        %v1211 = vpop.f32.mrb[0].mxu0
        %v1212 = vadd.f32 %v752, %v1211
        %v1213 = vpop.f32.mrb[0].mxu0
        %v1214 = vpop.f32.mrb[0].mxu0
        %v1215 = vadd.f32 %v752, %v1214
        %v1216 = vpop.f32.mrb[0].mxu0
        %1217 = vmatprep.mubr.bf16.mxu0 %v615
        %1218 = vmatmul.mubr.bf16.gmra.mrb[0].mxu0 %v614
        %v1219 = vpop.f32.mrb[0].mxu0
        %v1220 = vadd.f32 %v752, %v1219
        %v1221 = vpop.f32.mrb[0].mxu0
        %v1222 = vpop.f32.mrb[0].mxu0
        %v1223 = vadd.f32 %v752, %v1222
        %v1224 = vpop.f32.mrb[0].mxu0
        %1225 = vmatprep.mubr.bf16.mxu0 %v622
        %1226 = vmatmul.mubr.bf16.gmra.mrb[0].mxu0 %v621
        %v1227 = vpop.f32.mrb[0].mxu0
        %v1228 = vadd.f32 %v752, %v1227
        %v1229 = vpop.f32.mrb[0].mxu0
        %v1230 = vpop.f32.mrb[0].mxu0
        %v1231 = vadd.f32 %v752, %v1230
        %v1232 = vpop.f32.mrb[0].mxu0
        %1233 = vmatprep.mubr.bf16.mxu0 %v629
        %1234 = vmatmul.mubr.bf16.gmra.mrb[0].mxu0 %v628
        %v1235 = vpop.f32.mrb[0].mxu0
        %v1236 = vadd.f32 %v752, %v1235
        %v1237 = vpop.f32.mrb[0].mxu0
        %v1238 = vpop.f32.mrb[0].mxu0
        %v1239 = vadd.f32 %v752, %v1238
        %v1240 = vpop.f32.mrb[0].mxu0
        %1241 = vmatprep.mubr.bf16.mxu0 %v636
        %1242 = vmatmul.mubr.bf16.gmra.mrb[0].mxu0 %v635
        %v1243 = vpop.f32.mrb[0].mxu0
        %v1244 = vadd.f32 %v752, %v1243
        %v1245 = vpop.f32.mrb[0].mxu0
        %v1246 = vpop.f32.mrb[0].mxu0
        %v1247 = vadd.f32 %v752, %v1246
        %v1248 = vpop.f32.mrb[0].mxu0
        %1249 = vmatprep.mubr.bf16.mxu0 %v643
        %1250 = vmatmul.mubr.bf16.gmra.mrb[0].mxu0 %v642
        %v1251 = vpop.f32.mrb[0].mxu0
        %v1252 = vadd.f32 %v752, %v1251
        %v1253 = vpop.f32.mrb[0].mxu0
        %v1254 = vpop.f32.mrb[0].mxu0
        %v1255 = vadd.f32 %v752, %v1254
        %v1256 = vpop.f32.mrb[0].mxu0
        %1257 = vdwg.mxu0
        %1258 = vmatprep.subr.bf16.mxu0 0
        %1259 = vmatpush1.bf16.msra.mxu0 %v966
        %1260 = vmatprep.subr.bf16.mxu0 0
        %1261 = vmatpush1.bf16.msra.mxu0 %v967
        %1262 = vmatprep.subr.bf16.mxu0 0
        %1263 = vmatpush1.bf16.msra.mxu0 %v968
        %1264 = vmatprep.subr.bf16.mxu0 0
        %1265 = vmatpush1.bf16.msra.mxu0 %v969
        %1266 = vmatprep.subr.bf16.mxu0 0
        %1267 = vmatpush1.bf16.msra.mxu0 %v970
        %1268 = vmatprep.subr.bf16.mxu0 0
        %1269 = vmatpush1.bf16.msra.mxu0 %v971
        %1270 = vmatprep.subr.bf16.mxu0 0
        %1271 = vmatpush1.bf16.msra.mxu0 %v972
        %1272 = vmatprep.subr.bf16.mxu0 0
        %1273 = vmatpush1.bf16.msra.mxu0 %v973
        %1274 = vmatprep.subr.bf16.mxu0 0
        %1275 = vmatpush1.bf16.msra.mxu0 %v974
        %1276 = vmatprep.subr.bf16.mxu0 0
        %1277 = vmatpush1.bf16.msra.mxu0 %v975
        %1278 = vmatprep.subr.bf16.mxu0 0
        %1279 = vmatpush1.bf16.msra.mxu0 %v976
        %1280 = vmatprep.subr.bf16.mxu0 0
        %1281 = vmatpush1.bf16.msra.mxu0 %v977
        %1282 = vmatprep.subr.bf16.mxu0 0
        %1283 = vmatpush1.bf16.msra.mxu0 %v978
        %1284 = vmatprep.subr.bf16.mxu0 0
        %1285 = vmatpush1.bf16.msra.mxu0 %v979
        %1286 = vmatprep.subr.bf16.mxu0 0
        %1287 = vmatpush1.bf16.msra.mxu0 %v980
        %1288 = vmatprep.subr.bf16.mxu0 0
        %1289 = vmatpush1.bf16.msra.mxu0 %v981
        %1290 = vmatprep.mubr.bf16.mxu0 %v540
        %1291 = vmatmul.mubr.bf16.gmra.mrb[0].mxu0 %v539
        %v1292 = vpop.f32.mrb[0].mxu0
        %v1293 = vadd.f32 %v1132, %v1292
        %v1294 = vpop.f32.mrb[0].mxu0
        %v1295 = vpop.f32.mrb[0].mxu0
        %v1296 = vadd.f32 %v1135, %v1295
        %v1297 = vpop.f32.mrb[0].mxu0
        %1298 = vmatprep.mubr.bf16.mxu0 %v547
        %1299 = vmatmul.mubr.bf16.gmra.mrb[0].mxu0 %v546
        %v1300 = vpop.f32.mrb[0].mxu0
        %v1301 = vadd.f32 %v1140, %v1300
        %v1302 = vpop.f32.mrb[0].mxu0
        %v1303 = vpop.f32.mrb[0].mxu0
        %v1304 = vadd.f32 %v1143, %v1303
        %v1305 = vpop.f32.mrb[0].mxu0
        %1306 = vmatprep.mubr.bf16.mxu0 %v554
        %1307 = vmatmul.mubr.bf16.gmra.mrb[0].mxu0 %v553
        %v1308 = vpop.f32.mrb[0].mxu0
        %v1309 = vadd.f32 %v1148, %v1308
        %v1310 = vpop.f32.mrb[0].mxu0
        %v1311 = vpop.f32.mrb[0].mxu0
        %v1312 = vadd.f32 %v1151, %v1311
        %v1313 = vpop.f32.mrb[0].mxu0
        %1314 = vmatprep.mubr.bf16.mxu0 %v561
        %1315 = vmatmul.mubr.bf16.gmra.mrb[0].mxu0 %v560
        %v1316 = vpop.f32.mrb[0].mxu0
        %v1317 = vadd.f32 %v1156, %v1316
        %v1318 = vpop.f32.mrb[0].mxu0
        %v1319 = vpop.f32.mrb[0].mxu0
        %v1320 = vadd.f32 %v1159, %v1319
        %v1321 = vpop.f32.mrb[0].mxu0
        %1322 = vmatprep.mubr.bf16.mxu0 %v568
        %1323 = vmatmul.mubr.bf16.gmra.mrb[0].mxu0 %v567
        %v1324 = vpop.f32.mrb[0].mxu0
        %v1325 = vadd.f32 %v1164, %v1324
        %v1326 = vpop.f32.mrb[0].mxu0
        %v1327 = vpop.f32.mrb[0].mxu0
        %v1328 = vadd.f32 %v1167, %v1327
        %v1329 = vpop.f32.mrb[0].mxu0
        %1330 = vmatprep.mubr.bf16.mxu0 %v575
        %1331 = vmatmul.mubr.bf16.gmra.mrb[0].mxu0 %v574
        %v1332 = vpop.f32.mrb[0].mxu0
        %v1333 = vadd.f32 %v1172, %v1332
        %v1334 = vpop.f32.mrb[0].mxu0
        %v1335 = vpop.f32.mrb[0].mxu0
        %v1336 = vadd.f32 %v1175, %v1335
        %v1337 = vpop.f32.mrb[0].mxu0
        %1338 = vmatprep.mubr.bf16.mxu0 %v582
        %1339 = vmatmul.mubr.bf16.gmra.mrb[0].mxu0 %v581
        %v1340 = vpop.f32.mrb[0].mxu0
        %v1341 = vadd.f32 %v1180, %v1340
        %v1342 = vpop.f32.mrb[0].mxu0
        %v1343 = vpop.f32.mrb[0].mxu0
        %v1344 = vadd.f32 %v1183, %v1343
        %v1345 = vpop.f32.mrb[0].mxu0
        %1346 = vmatprep.mubr.bf16.mxu0 %v589
        %1347 = vmatmul.mubr.bf16.gmra.mrb[0].mxu0 %v588
        %v1348 = vpop.f32.mrb[0].mxu0
        %v1349 = vadd.f32 %v1188, %v1348
        %v1350 = vpop.f32.mrb[0].mxu0
        %v1351 = vpop.f32.mrb[0].mxu0
        %v1352 = vadd.f32 %v1191, %v1351
        %v1353 = vpop.f32.mrb[0].mxu0
        %1354 = vmatprep.mubr.bf16.mxu0 %v596
        %1355 = vmatmul.mubr.bf16.gmra.mrb[0].mxu0 %v595
        %v1356 = vpop.f32.mrb[0].mxu0
        %v1357 = vadd.f32 %v1196, %v1356
        %v1358 = vpop.f32.mrb[0].mxu0
        %v1359 = vpop.f32.mrb[0].mxu0
        %v1360 = vadd.f32 %v1199, %v1359
        %v1361 = vpop.f32.mrb[0].mxu0
        %1362 = vmatprep.mubr.bf16.mxu0 %v603
        %1363 = vmatmul.mubr.bf16.gmra.mrb[0].mxu0 %v602
        %v1364 = vpop.f32.mrb[0].mxu0
        %v1365 = vadd.f32 %v1204, %v1364
        %v1366 = vpop.f32.mrb[0].mxu0
        %v1367 = vpop.f32.mrb[0].mxu0
        %v1368 = vadd.f32 %v1207, %v1367
        %v1369 = vpop.f32.mrb[0].mxu0
        %1370 = vmatprep.mubr.bf16.mxu0 %v610
        %1371 = vmatmul.mubr.bf16.gmra.mrb[0].mxu0 %v609
        %v1372 = vpop.f32.mrb[0].mxu0
        %v1373 = vadd.f32 %v1212, %v1372
        %v1374 = vpop.f32.mrb[0].mxu0
        %v1375 = vpop.f32.mrb[0].mxu0
        %v1376 = vadd.f32 %v1215, %v1375
        %v1377 = vpop.f32.mrb[0].mxu0
        %1378 = vmatprep.mubr.bf16.mxu0 %v617
        %1379 = vmatmul.mubr.bf16.gmra.mrb[0].mxu0 %v616
        %v1380 = vpop.f32.mrb[0].mxu0
        %v1381 = vadd.f32 %v1220, %v1380
        %v1382 = vpop.f32.mrb[0].mxu0
        %v1383 = vpop.f32.mrb[0].mxu0
        %v1384 = vadd.f32 %v1223, %v1383
        %v1385 = vpop.f32.mrb[0].mxu0
        %1386 = vmatprep.mubr.bf16.mxu0 %v624
        %1387 = vmatmul.mubr.bf16.gmra.mrb[0].mxu0 %v623
        %v1388 = vpop.f32.mrb[0].mxu0
        %v1389 = vadd.f32 %v1228, %v1388
        %v1390 = vpop.f32.mrb[0].mxu0
        %v1391 = vpop.f32.mrb[0].mxu0
        %v1392 = vadd.f32 %v1231, %v1391
        %v1393 = vpop.f32.mrb[0].mxu0
        %1394 = vmatprep.mubr.bf16.mxu0 %v631
        %1395 = vmatmul.mubr.bf16.gmra.mrb[0].mxu0 %v630
        %v1396 = vpop.f32.mrb[0].mxu0
        %v1397 = vadd.f32 %v1236, %v1396
        %v1398 = vpop.f32.mrb[0].mxu0
        %v1399 = vpop.f32.mrb[0].mxu0
        %v1400 = vadd.f32 %v1239, %v1399
        %v1401 = vpop.f32.mrb[0].mxu0
        %1402 = vmatprep.mubr.bf16.mxu0 %v638
        %1403 = vmatmul.mubr.bf16.gmra.mrb[0].mxu0 %v637
        %v1404 = vpop.f32.mrb[0].mxu0
        %v1405 = vadd.f32 %v1244, %v1404
        %v1406 = vpop.f32.mrb[0].mxu0
        %v1407 = vpop.f32.mrb[0].mxu0
        %v1408 = vadd.f32 %v1247, %v1407
        %v1409 = vpop.f32.mrb[0].mxu0
        %1410 = vmatprep.mubr.bf16.mxu0 %v645
        %1411 = vmatmul.mubr.bf16.gmra.mrb[0].mxu0 %v644
        %v1412 = vpop.f32.mrb[0].mxu0
        %v1413 = vadd.f32 %v1252, %v1412
        %v1414 = vpop.f32.mrb[0].mxu0
        %v1415 = vpop.f32.mrb[0].mxu0
        %v1416 = vadd.f32 %v1255, %v1415
        %v1417 = vpop.f32.mrb[0].mxu0
        %1418 = vdwg.mxu0
        %1419 = vmatprep.subr.bf16.mxu0 0
        %1420 = vmatpush1.bf16.msra.mxu0 %v982
        %1421 = vmatprep.subr.bf16.mxu0 0
        %1422 = vmatpush1.bf16.msra.mxu0 %v983
        %1423 = vmatprep.subr.bf16.mxu0 0
        %1424 = vmatpush1.bf16.msra.mxu0 %v984
        %1425 = vmatprep.subr.bf16.mxu0 0
        %1426 = vmatpush1.bf16.msra.mxu0 %v985
        %1427 = vmatprep.subr.bf16.mxu0 0
        %1428 = vmatpush1.bf16.msra.mxu0 %v986
        %1429 = vmatprep.subr.bf16.mxu0 0
        %1430 = vmatpush1.bf16.msra.mxu0 %v987
        %1431 = vmatprep.subr.bf16.mxu0 0
        %1432 = vmatpush1.bf16.msra.mxu0 %v988
        %1433 = vmatprep.subr.bf16.mxu0 0
        %1434 = vmatpush1.bf16.msra.mxu0 %v989
        %1435 = vmatprep.subr.bf16.mxu0 0
        %1436 = vmatpush1.bf16.msra.mxu0 %v990
        %1437 = vmatprep.subr.bf16.mxu0 0
        %1438 = vmatpush1.bf16.msra.mxu0 %v991
        %1439 = vmatprep.subr.bf16.mxu0 0
        %1440 = vmatpush1.bf16.msra.mxu0 %v992
        %1441 = vmatprep.subr.bf16.mxu0 0
        %1442 = vmatpush1.bf16.msra.mxu0 %v993
        %1443 = vmatprep.subr.bf16.mxu0 0
        %1444 = vmatpush1.bf16.msra.mxu0 %v994
        %1445 = vmatprep.subr.bf16.mxu0 0
        %1446 = vmatpush1.bf16.msra.mxu0 %v995
        %1447 = vmatprep.subr.bf16.mxu0 0
        %1448 = vmatpush1.bf16.msra.mxu0 %v996
        %1449 = vmatprep.subr.bf16.mxu0 0
        %1450 = vmatpush1.bf16.msra.mxu0 %v997
        %1451 = vmatprep.mubr.bf16.mxu0 %v542
        %1452 = vmatmul.mubr.bf16.gmra.mrb[0].mxu0 %v541
        %v1453 = vpop.f32.mrb[0].mxu0
        %v1454 = vadd.f32 %v1293, %v1453
        %v1455 = vpop.f32.mrb[0].mxu0
        %v1456 = vpop.f32.mrb[0].mxu0
        %v1457 = vadd.f32 %v1296, %v1456
        %v1458 = vpop.f32.mrb[0].mxu0
        %1459 = vmatprep.mubr.bf16.mxu0 %v549
        %1460 = vmatmul.mubr.bf16.gmra.mrb[0].mxu0 %v548
        %v1461 = vpop.f32.mrb[0].mxu0
        %v1462 = vadd.f32 %v1301, %v1461
        %v1463 = vpop.f32.mrb[0].mxu0
        %v1464 = vpop.f32.mrb[0].mxu0
        %v1465 = vadd.f32 %v1304, %v1464
        %v1466 = vpop.f32.mrb[0].mxu0
        %1467 = vmatprep.mubr.bf16.mxu0 %v556
        %1468 = vmatmul.mubr.bf16.gmra.mrb[0].mxu0 %v555
        %v1469 = vpop.f32.mrb[0].mxu0
        %v1470 = vadd.f32 %v1309, %v1469
        %v1471 = vpop.f32.mrb[0].mxu0
        %v1472 = vpop.f32.mrb[0].mxu0
        %v1473 = vadd.f32 %v1312, %v1472
        %v1474 = vpop.f32.mrb[0].mxu0
        %1475 = vmatprep.mubr.bf16.mxu0 %v563
        %1476 = vmatmul.mubr.bf16.gmra.mrb[0].mxu0 %v562
        %v1477 = vpop.f32.mrb[0].mxu0
        %v1478 = vadd.f32 %v1317, %v1477
        %v1479 = vpop.f32.mrb[0].mxu0
        %v1480 = vpop.f32.mrb[0].mxu0
        %v1481 = vadd.f32 %v1320, %v1480
        %v1482 = vpop.f32.mrb[0].mxu0
        %1483 = vmatprep.mubr.bf16.mxu0 %v570
        %1484 = vmatmul.mubr.bf16.gmra.mrb[0].mxu0 %v569
        %v1485 = vpop.f32.mrb[0].mxu0
        %v1486 = vadd.f32 %v1325, %v1485
        %v1487 = vpop.f32.mrb[0].mxu0
        %v1488 = vpop.f32.mrb[0].mxu0
        %v1489 = vadd.f32 %v1328, %v1488
        %v1490 = vpop.f32.mrb[0].mxu0
        %1491 = vmatprep.mubr.bf16.mxu0 %v577
        %1492 = vmatmul.mubr.bf16.gmra.mrb[0].mxu0 %v576
        %v1493 = vpop.f32.mrb[0].mxu0
        %v1494 = vadd.f32 %v1333, %v1493
        %v1495 = vpop.f32.mrb[0].mxu0
        %v1496 = vpop.f32.mrb[0].mxu0
        %v1497 = vadd.f32 %v1336, %v1496
        %v1498 = vpop.f32.mrb[0].mxu0
        %1499 = vmatprep.mubr.bf16.mxu0 %v584
        %1500 = vmatmul.mubr.bf16.gmra.mrb[0].mxu0 %v583
        %v1501 = vpop.f32.mrb[0].mxu0
        %v1502 = vadd.f32 %v1341, %v1501
        %v1503 = vpop.f32.mrb[0].mxu0
        %v1504 = vpop.f32.mrb[0].mxu0
        %v1505 = vadd.f32 %v1344, %v1504
        %v1506 = vpop.f32.mrb[0].mxu0
        %1507 = vmatprep.mubr.bf16.mxu0 %v591
        %1508 = vmatmul.mubr.bf16.gmra.mrb[0].mxu0 %v590
        %v1509 = vpop.f32.mrb[0].mxu0
        %v1510 = vadd.f32 %v1349, %v1509
        %v1511 = vpop.f32.mrb[0].mxu0
        %v1512 = vpop.f32.mrb[0].mxu0
        %v1513 = vadd.f32 %v1352, %v1512
        %v1514 = vpop.f32.mrb[0].mxu0
        %1515 = vmatprep.mubr.bf16.mxu0 %v598
        %1516 = vmatmul.mubr.bf16.gmra.mrb[0].mxu0 %v597
        %v1517 = vpop.f32.mrb[0].mxu0
        %v1518 = vadd.f32 %v1357, %v1517
        %v1519 = vpop.f32.mrb[0].mxu0
        %v1520 = vpop.f32.mrb[0].mxu0
        %v1521 = vadd.f32 %v1360, %v1520
        %v1522 = vpop.f32.mrb[0].mxu0
        %1523 = vmatprep.mubr.bf16.mxu0 %v605
        %1524 = vmatmul.mubr.bf16.gmra.mrb[0].mxu0 %v604
        %v1525 = vpop.f32.mrb[0].mxu0
        %v1526 = vadd.f32 %v1365, %v1525
        %v1527 = vpop.f32.mrb[0].mxu0
        %v1528 = vpop.f32.mrb[0].mxu0
        %v1529 = vadd.f32 %v1368, %v1528
        %v1530 = vpop.f32.mrb[0].mxu0
        %1531 = vmatprep.mubr.bf16.mxu0 %v612
        %1532 = vmatmul.mubr.bf16.gmra.mrb[0].mxu0 %v611
        %v1533 = vpop.f32.mrb[0].mxu0
        %v1534 = vadd.f32 %v1373, %v1533
        %v1535 = vpop.f32.mrb[0].mxu0
        %v1536 = vpop.f32.mrb[0].mxu0
        %v1537 = vadd.f32 %v1376, %v1536
        %v1538 = vpop.f32.mrb[0].mxu0
        %1539 = vmatprep.mubr.bf16.mxu0 %v619
        %1540 = vmatmul.mubr.bf16.gmra.mrb[0].mxu0 %v618
        %v1541 = vpop.f32.mrb[0].mxu0
        %v1542 = vadd.f32 %v1381, %v1541
        %v1543 = vpop.f32.mrb[0].mxu0
        %v1544 = vpop.f32.mrb[0].mxu0
        %v1545 = vadd.f32 %v1384, %v1544
        %v1546 = vpop.f32.mrb[0].mxu0
        %1547 = vmatprep.mubr.bf16.mxu0 %v626
        %1548 = vmatmul.mubr.bf16.gmra.mrb[0].mxu0 %v625
        %v1549 = vpop.f32.mrb[0].mxu0
        %v1550 = vadd.f32 %v1389, %v1549
        %v1551 = vpop.f32.mrb[0].mxu0
        %v1552 = vpop.f32.mrb[0].mxu0
        %v1553 = vadd.f32 %v1392, %v1552
        %v1554 = vpop.f32.mrb[0].mxu0
        %1555 = vmatprep.mubr.bf16.mxu0 %v633
        %1556 = vmatmul.mubr.bf16.gmra.mrb[0].mxu0 %v632
        %v1557 = vpop.f32.mrb[0].mxu0
        %v1558 = vadd.f32 %v1397, %v1557
        %v1559 = vpop.f32.mrb[0].mxu0
        %v1560 = vpop.f32.mrb[0].mxu0
        %v1561 = vadd.f32 %v1400, %v1560
        %v1562 = vpop.f32.mrb[0].mxu0
        %1563 = vmatprep.mubr.bf16.mxu0 %v640
        %1564 = vmatmul.mubr.bf16.gmra.mrb[0].mxu0 %v639
        %v1565 = vpop.f32.mrb[0].mxu0
        %v1566 = vadd.f32 %v1405, %v1565
        %v1567 = vpop.f32.mrb[0].mxu0
        %v1568 = vpop.f32.mrb[0].mxu0
        %v1569 = vadd.f32 %v1408, %v1568
        %v1570 = vpop.f32.mrb[0].mxu0
        %1571 = vmatprep.mubr.bf16.mxu0 %v647
        %1572 = vmatmul.mubr.bf16.gmra.mrb[0].mxu0 %v646
        %v1573 = vpop.f32.mrb[0].mxu0
        %v1574 = vadd.f32 %v1413, %v1573
        %v1575 = vpop.f32.mrb[0].mxu0
        %v1576 = vpop.f32.mrb[0].mxu0
        %v1577 = vadd.f32 %v1416, %v1576
        %v1578 = vpop.f32.mrb[0].mxu0
        %1579 = vdwg.mxu0
        %1580 = vmatprep.subr.bf16.mxu0 0
        %1581 = vmatpush1.bf16.msra.mxu0 %v998
        %1582 = vmatprep.subr.bf16.mxu0 0
        %1583 = vmatpush1.bf16.msra.mxu0 0
        %1584 = vmatprep.subr.bf16.mxu0 0
        %1585 = vmatpush1.bf16.msra.mxu0 0
        %1586 = vmatprep.subr.bf16.mxu0 0
        %1587 = vmatpush1.bf16.msra.mxu0 0
        %1588 = vmatprep.subr.bf16.mxu0 0
        %1589 = vmatpush1.bf16.msra.mxu0 0
        %1590 = vmatprep.subr.bf16.mxu0 0
        %1591 = vmatpush1.bf16.msra.mxu0 0
        %1592 = vmatprep.subr.bf16.mxu0 0
        %1593 = vmatpush1.bf16.msra.mxu0 0
        %1594 = vmatprep.subr.bf16.mxu0 0
        %1595 = vmatpush1.bf16.msra.mxu0 0
        %1596 = vmatprep.subr.bf16.mxu0 0
        %1597 = vmatpush1.bf16.msra.mxu0 0
        %1598 = vmatprep.subr.bf16.mxu0 0
        %1599 = vmatpush1.bf16.msra.mxu0 0
        %1600 = vmatprep.subr.bf16.mxu0 0
        %1601 = vmatpush1.bf16.msra.mxu0 0
        %1602 = vmatprep.subr.bf16.mxu0 0
        %1603 = vmatpush1.bf16.msra.mxu0 0
        %1604 = vmatprep.subr.bf16.mxu0 0
        %1605 = vmatpush1.bf16.msra.mxu0 0
        %1606 = vmatprep.subr.bf16.mxu0 0
        %1607 = vmatpush1.bf16.msra.mxu0 0
        %1608 = vmatprep.subr.bf16.mxu0 0
        %1609 = vmatpush1.bf16.msra.mxu0 0
        %1610 = vmatprep.subr.bf16.mxu0 0
        %1611 = vmatpush1.bf16.msra.mxu0 0
        %1612 = vmatprep.mubr.bf16.mxu0 0
        %1613 = vmatmul.mubr.bf16.gmra.mrb[0].mxu0 %v1050
        %v1614 = vpop.f32.mrb[0].mxu0
        %v1615 = vadd.f32 %v1454, %v1614
        %v1616 = vpop.f32.mrb[0].mxu0
        %v1617 = vpop.f32.mrb[0].mxu0
        %v1618 = vadd.f32 %v1457, %v1617
        %v1619 = vpop.f32.mrb[0].mxu0
        %1620 = vmatprep.mubr.bf16.mxu0 0
        %1621 = vmatmul.mubr.bf16.gmra.mrb[0].mxu0 %v1053
        %v1622 = vpop.f32.mrb[0].mxu0
        %v1623 = vadd.f32 %v1462, %v1622
        %v1624 = vpop.f32.mrb[0].mxu0
        %v1625 = vpop.f32.mrb[0].mxu0
        %v1626 = vadd.f32 %v1465, %v1625
        %v1627 = vpop.f32.mrb[0].mxu0
        %1628 = vmatprep.mubr.bf16.mxu0 0
        %1629 = vmatmul.mubr.bf16.gmra.mrb[0].mxu0 %v1056
        %v1630 = vpop.f32.mrb[0].mxu0
        %v1631 = vadd.f32 %v1470, %v1630
        %v1632 = vpop.f32.mrb[0].mxu0
        %v1633 = vpop.f32.mrb[0].mxu0
        %v1634 = vadd.f32 %v1473, %v1633
        %v1635 = vpop.f32.mrb[0].mxu0
        %1636 = vmatprep.mubr.bf16.mxu0 0
        %1637 = vmatmul.mubr.bf16.gmra.mrb[0].mxu0 %v1059
        %v1638 = vpop.f32.mrb[0].mxu0
        %v1639 = vadd.f32 %v1478, %v1638
        %v1640 = vpop.f32.mrb[0].mxu0
        %v1641 = vpop.f32.mrb[0].mxu0
        %v1642 = vadd.f32 %v1481, %v1641
        %v1643 = vpop.f32.mrb[0].mxu0
        %1644 = vmatprep.mubr.bf16.mxu0 0
        %1645 = vmatmul.mubr.bf16.gmra.mrb[0].mxu0 %v1062
        %v1646 = vpop.f32.mrb[0].mxu0
        %v1647 = vadd.f32 %v1486, %v1646
        %v1648 = vpop.f32.mrb[0].mxu0
        %v1649 = vpop.f32.mrb[0].mxu0
        %v1650 = vadd.f32 %v1489, %v1649
        %v1651 = vpop.f32.mrb[0].mxu0
        %1652 = vmatprep.mubr.bf16.mxu0 0
        %1653 = vmatmul.mubr.bf16.gmra.mrb[0].mxu0 %v1065
        %v1654 = vpop.f32.mrb[0].mxu0
        %v1655 = vadd.f32 %v1494, %v1654
        %v1656 = vpop.f32.mrb[0].mxu0
        %v1657 = vpop.f32.mrb[0].mxu0
        %v1658 = vadd.f32 %v1497, %v1657
        %v1659 = vpop.f32.mrb[0].mxu0
        %1660 = vmatprep.mubr.bf16.mxu0 0
        %1661 = vmatmul.mubr.bf16.gmra.mrb[0].mxu0 %v1068
        %v1662 = vpop.f32.mrb[0].mxu0
        %v1663 = vadd.f32 %v1502, %v1662
        %v1664 = vpop.f32.mrb[0].mxu0
        %v1665 = vpop.f32.mrb[0].mxu0
        %v1666 = vadd.f32 %v1505, %v1665
        %v1667 = vpop.f32.mrb[0].mxu0
        %1668 = vmatprep.mubr.bf16.mxu0 0
        %1669 = vmatmul.mubr.bf16.gmra.mrb[0].mxu0 %v1071
        %v1670 = vpop.f32.mrb[0].mxu0
        %v1671 = vadd.f32 %v1510, %v1670
        %v1672 = vpop.f32.mrb[0].mxu0
        %v1673 = vpop.f32.mrb[0].mxu0
        %v1674 = vadd.f32 %v1513, %v1673
        %v1675 = vpop.f32.mrb[0].mxu0
        %1676 = vmatprep.mubr.bf16.mxu0 0
        %1677 = vmatmul.mubr.bf16.gmra.mrb[0].mxu0 %v1074
        %v1678 = vpop.f32.mrb[0].mxu0
        %v1679 = vadd.f32 %v1518, %v1678
        %v1680 = vpop.f32.mrb[0].mxu0
        %v1681 = vpop.f32.mrb[0].mxu0
        %v1682 = vadd.f32 %v1521, %v1681
        %v1683 = vpop.f32.mrb[0].mxu0
        %1684 = vmatprep.mubr.bf16.mxu0 0
        %1685 = vmatmul.mubr.bf16.gmra.mrb[0].mxu0 %v1077
        %v1686 = vpop.f32.mrb[0].mxu0
        %v1687 = vadd.f32 %v1526, %v1686
        %v1688 = vpop.f32.mrb[0].mxu0
        %v1689 = vpop.f32.mrb[0].mxu0
        %v1690 = vadd.f32 %v1529, %v1689
        %v1691 = vpop.f32.mrb[0].mxu0
        %1692 = vmatprep.mubr.bf16.mxu0 0
        %1693 = vmatmul.mubr.bf16.gmra.mrb[0].mxu0 %v1080
        %v1694 = vpop.f32.mrb[0].mxu0
        %v1695 = vadd.f32 %v1534, %v1694
        %v1696 = vpop.f32.mrb[0].mxu0
        %v1697 = vpop.f32.mrb[0].mxu0
        %v1698 = vadd.f32 %v1537, %v1697
        %v1699 = vpop.f32.mrb[0].mxu0
        %1700 = vmatprep.mubr.bf16.mxu0 0
        %1701 = vmatmul.mubr.bf16.gmra.mrb[0].mxu0 %v1083
        %v1702 = vpop.f32.mrb[0].mxu0
        %v1703 = vadd.f32 %v1542, %v1702
        %v1704 = vpop.f32.mrb[0].mxu0
        %v1705 = vpop.f32.mrb[0].mxu0
        %v1706 = vadd.f32 %v1545, %v1705
        %v1707 = vpop.f32.mrb[0].mxu0
        %1708 = vmatprep.mubr.bf16.mxu0 0
        %1709 = vmatmul.mubr.bf16.gmra.mrb[0].mxu0 %v1086
        %v1710 = vpop.f32.mrb[0].mxu0
        %v1711 = vadd.f32 %v1550, %v1710
        %v1712 = vpop.f32.mrb[0].mxu0
        %v1713 = vpop.f32.mrb[0].mxu0
        %v1714 = vadd.f32 %v1553, %v1713
        %v1715 = vpop.f32.mrb[0].mxu0
        %1716 = vmatprep.mubr.bf16.mxu0 0
        %1717 = vmatmul.mubr.bf16.gmra.mrb[0].mxu0 %v1089
        %v1718 = vpop.f32.mrb[0].mxu0
        %v1719 = vadd.f32 %v1558, %v1718
        %v1720 = vpop.f32.mrb[0].mxu0
        %v1721 = vpop.f32.mrb[0].mxu0
        %v1722 = vadd.f32 %v1561, %v1721
        %v1723 = vpop.f32.mrb[0].mxu0
        %1724 = vmatprep.mubr.bf16.mxu0 0
        %1725 = vmatmul.mubr.bf16.gmra.mrb[0].mxu0 %v1092
        %v1726 = vpop.f32.mrb[0].mxu0
        %v1727 = vadd.f32 %v1566, %v1726
        %v1728 = vpop.f32.mrb[0].mxu0
        %v1729 = vpop.f32.mrb[0].mxu0
        %v1730 = vadd.f32 %v1569, %v1729
        %v1731 = vpop.f32.mrb[0].mxu0
        %1732 = vmatprep.mubr.bf16.mxu0 0
        %1733 = vmatmul.mubr.bf16.gmra.mrb[0].mxu0 %v1095
        %v1734 = vpop.f32.mrb[0].mxu0
        %v1735 = vadd.f32 %v1574, %v1734
        %v1736 = vpop.f32.mrb[0].mxu0
        %v1737 = vpop.f32.mrb[0].mxu0
        %v1738 = vadd.f32 %v1577, %v1737
        %v1739 = vpop.f32.mrb[0].mxu0
        %1740 = vdwg.mxu0
        %v1741 = vmax.f32 %v1615, 0.0
        %v1742 = vmax.f32 %v1618, 0.0
        %v1743 = vmax.f32 %v1623, 0.0
        %v1744 = vmax.f32 %v1626, 0.0
        %v1745 = vmax.f32 %v1631, 0.0
        %v1746 = vmax.f32 %v1634, 0.0
        %v1747 = vmax.f32 %v1639, 0.0
        %v1748 = vmax.f32 %v1642, 0.0
        %v1749 = vmax.f32 %v1647, 0.0
        %v1750 = vmax.f32 %v1650, 0.0
        %v1751 = vmax.f32 %v1655, 0.0
        %v1752 = vmax.f32 %v1658, 0.0
        %v1753 = vmax.f32 %v1663, 0.0
        %v1754 = vmax.f32 %v1666, 0.0
        %v1755 = vmax.f32 %v1671, 0.0
        %v1756 = vmax.f32 %v1674, 0.0
        %v1757 = vmax.f32 %v1679, 0.0
        %v1758 = vmax.f32 %v1682, 0.0
        %v1759 = vmax.f32 %v1687, 0.0
        %v1760 = vmax.f32 %v1690, 0.0
        %v1761 = vmax.f32 %v1695, 0.0
        %v1762 = vmax.f32 %v1698, 0.0
        %v1763 = vmax.f32 %v1703, 0.0
        %v1764 = vmax.f32 %v1706, 0.0
        %v1765 = vmax.f32 %v1711, 0.0
        %v1766 = vmax.f32 %v1714, 0.0
        %v1767 = vmax.f32 %v1719, 0.0
        %v1768 = vmax.f32 %v1722, 0.0
        %v1769 = vmax.f32 %v1727, 0.0
        %v1770 = vmax.f32 %v1730, 0.0
        %v1771 = vmax.f32 %v1735, 0.0
        %v1772 = vmax.f32 %v1738, 0.0
        %v1773 = vpack.c.bf16 %v1742, %v1741
        %v1774 = vpack.c.bf16 %v1744, %v1743
        %v1775 = vpack.c.bf16 %v1746, %v1745
        %v1776 = vpack.c.bf16 %v1748, %v1747
        %v1777 = vpack.c.bf16 %v1750, %v1749
        %v1778 = vpack.c.bf16 %v1752, %v1751
        %v1779 = vpack.c.bf16 %v1754, %v1753
        %v1780 = vpack.c.bf16 %v1756, %v1755
        %v1781 = vpack.c.bf16 %v1758, %v1757
        %v1782 = vpack.c.bf16 %v1760, %v1759
        %v1783 = vpack.c.bf16 %v1762, %v1761
        %v1784 = vpack.c.bf16 %v1764, %v1763
        %v1785 = vpack.c.bf16 %v1766, %v1765
        %v1786 = vpack.c.bf16 %v1768, %v1767
        %v1787 = vpack.c.bf16 %v1770, %v1769
        %v1788 = vpack.c.bf16 %v1772, %v1771
        %v1789 = vld [vmem:[%s3] sm:$0xf]
        %v1790 = vld [vmem:[%s3 + $0x4] sm:$0xf]
        %v1791 = vld [vmem:[%s3 + $0x8] sm:$0xf]
        %v1792 = vld [vmem:[%s3 + $0xc] sm:$0xf]
        %v1793 = vld [vmem:[%s3 + $0x10] sm:$0xf]
        %v1794 = vld [vmem:[%s3 + $0x14] sm:$0xf]
        %v1795 = vld [vmem:[%s3 + $0x18] sm:$0xf]
        %v1796 = vld [vmem:[%s3 + $0x1c] sm:$0xf]
        %v1797 = vld [vmem:[%s3 + $0x20] sm:$0xf]
        %v1798 = vld [vmem:[%s3 + $0x24] sm:$0xf]
        %v1799 = vld [vmem:[%s3 + $0x28] sm:$0xf]
        %v1800 = vld [vmem:[%s3 + $0x2c] sm:$0xf]
        %v1801 = vld [vmem:[%s3 + $0x30] sm:$0xf]
        %v1802 = vld [vmem:[%s3 + $0x34] sm:$0xf]
        %v1803 = vld [vmem:[%s3 + $0x38] sm:$0xf]
        %v1804 = vld [vmem:[%s3 + $0x3c] sm:$0xf]
        %v1805 = vld [vmem:[%s4] sm:$0x1]
        %v1807 = vlaneseq
        %v1808 = vshrl.u32 %v1807, 7
        %v1809 = vsub.s32 0, %v1808
        %v1810 = vrot.slane %v1805, %v1809
        %v1828 = vunpack.c.l.b16 %v1789
        %v1829 = vunpack.c.l.b16 %v1790
        %v1830 = vunpack.c.l.b16 %v1791
        %v1831 = vunpack.c.l.b16 %v1792
        %v1832 = vunpack.c.l.b16 %v1793
        %v1833 = vunpack.c.l.b16 %v1794
        %v1834 = vunpack.c.l.b16 %v1795
        %v1835 = vunpack.c.l.b16 %v1796
        %v1836 = vunpack.c.l.b16 %v1797
        %v1837 = vunpack.c.l.b16 %v1798
        %v1838 = vunpack.c.l.b16 %v1799
        %v1839 = vunpack.c.l.b16 %v1800
        %v1840 = vunpack.c.l.b16 %v1801
        %v1841 = vunpack.c.l.b16 %v1802
        %v1842 = vunpack.c.l.b16 %v1803
        %v1843 = vunpack.c.l.b16 %v1804
        %v1844 = vpack.c.b16 %v1829, %v1828
        %v1845 = vpack.c.b16 %v1831, %v1830
        %v1846 = vpack.c.b16 %v1833, %v1832
        %v1847 = vpack.c.b16 %v1835, %v1834
        %v1848 = vpack.c.b16 %v1837, %v1836
        %v1849 = vpack.c.b16 %v1839, %v1838
        %v1850 = vpack.c.b16 %v1841, %v1840
        %v1851 = vpack.c.b16 %v1843, %v1842
        %1860 = vmatprep.subr.bf16.mxu0 0
        %1861 = vmatpush1.bf16.msra.mxu0 %v1844
        %1862 = vmatprep.subr.bf16.mxu0 0
        %1863 = vmatpush1.bf16.msra.mxu0 %v1845
        %1864 = vmatprep.subr.bf16.mxu0 0
        %1865 = vmatpush1.bf16.msra.mxu0 %v1846
        %1866 = vmatprep.subr.bf16.mxu0 0
        %1867 = vmatpush1.bf16.msra.mxu0 %v1847
        %1868 = vmatprep.subr.bf16.mxu0 0
        %1869 = vmatpush1.bf16.msra.mxu0 %v1848
        %1870 = vmatprep.subr.bf16.mxu0 0
        %1871 = vmatpush1.bf16.msra.mxu0 %v1849
        %1872 = vmatprep.subr.bf16.mxu0 0
        %1873 = vmatpush1.bf16.msra.mxu0 %v1850
        %1874 = vmatprep.subr.bf16.mxu0 0
        %1875 = vmatpush1.bf16.msra.mxu0 %v1851
        %1876 = vmatprep.subr.bf16.mxu0 0
        %1877 = vmatpush1.bf16.msra.mxu0 0
        %1878 = vmatprep.subr.bf16.mxu0 0
        %1879 = vmatpush1.bf16.msra.mxu0 0
        %1880 = vmatprep.subr.bf16.mxu0 0
        %1881 = vmatpush1.bf16.msra.mxu0 0
        %1882 = vmatprep.subr.bf16.mxu0 0
        %1883 = vmatpush1.bf16.msra.mxu0 0
        %1884 = vmatprep.subr.bf16.mxu0 0
        %1885 = vmatpush1.bf16.msra.mxu0 0
        %1886 = vmatprep.subr.bf16.mxu0 0
        %1887 = vmatpush1.bf16.msra.mxu0 0
        %1888 = vmatprep.subr.bf16.mxu0 0
        %1889 = vmatpush1.bf16.msra.mxu0 0
        %1890 = vmatprep.subr.bf16.mxu0 0
        %1891 = vmatpush1.bf16.msra.mxu0 0
        %1892 = vmatprep.mubr.bf16.mxu0 0
        %1893 = vmatmul.mubr.bf16.gmra.mrb[0].mxu0 %v1773
        %v1894 = vpop.f32.mrb[0].mxu0
        %v1895 = vadd.f32 %v1810, %v1894
        %v1896 = vpop.f32.mrb[0].mxu0
        %v1897 = vpop.f32.mrb[0].mxu0
        %v1898 = vadd.f32 %v1810, %v1897
        %v1899 = vpop.f32.mrb[0].mxu0
        %1900 = vmatprep.mubr.bf16.mxu0 0
        %1901 = vmatmul.mubr.bf16.gmra.mrb[0].mxu0 %v1774
        %v1902 = vpop.f32.mrb[0].mxu0
        %v1903 = vadd.f32 %v1810, %v1902
        %v1904 = vpop.f32.mrb[0].mxu0
        %v1905 = vpop.f32.mrb[0].mxu0
        %v1906 = vadd.f32 %v1810, %v1905
        %v1907 = vpop.f32.mrb[0].mxu0
        %1908 = vmatprep.mubr.bf16.mxu0 0
        %1909 = vmatmul.mubr.bf16.gmra.mrb[0].mxu0 %v1775
        %v1910 = vpop.f32.mrb[0].mxu0
        %v1911 = vadd.f32 %v1810, %v1910
        %v1912 = vpop.f32.mrb[0].mxu0
        %v1913 = vpop.f32.mrb[0].mxu0
        %v1914 = vadd.f32 %v1810, %v1913
        %v1915 = vpop.f32.mrb[0].mxu0
        %1916 = vmatprep.mubr.bf16.mxu0 0
        %1917 = vmatmul.mubr.bf16.gmra.mrb[0].mxu0 %v1776
        %v1918 = vpop.f32.mrb[0].mxu0
        %v1919 = vadd.f32 %v1810, %v1918
        %v1920 = vpop.f32.mrb[0].mxu0
        %v1921 = vpop.f32.mrb[0].mxu0
        %v1922 = vadd.f32 %v1810, %v1921
        %v1923 = vpop.f32.mrb[0].mxu0
        %1924 = vmatprep.mubr.bf16.mxu0 0
        %1925 = vmatmul.mubr.bf16.gmra.mrb[0].mxu0 %v1777
        %v1926 = vpop.f32.mrb[0].mxu0
        %v1927 = vadd.f32 %v1810, %v1926
        %v1928 = vpop.f32.mrb[0].mxu0
        %v1929 = vpop.f32.mrb[0].mxu0
        %v1930 = vadd.f32 %v1810, %v1929
        %v1931 = vpop.f32.mrb[0].mxu0
        %1932 = vmatprep.mubr.bf16.mxu0 0
        %1933 = vmatmul.mubr.bf16.gmra.mrb[0].mxu0 %v1778
        %v1934 = vpop.f32.mrb[0].mxu0
        %v1935 = vadd.f32 %v1810, %v1934
        %v1936 = vpop.f32.mrb[0].mxu0
        %v1937 = vpop.f32.mrb[0].mxu0
        %v1938 = vadd.f32 %v1810, %v1937
        %v1939 = vpop.f32.mrb[0].mxu0
        %1940 = vmatprep.mubr.bf16.mxu0 0
        %1941 = vmatmul.mubr.bf16.gmra.mrb[0].mxu0 %v1779
        %v1942 = vpop.f32.mrb[0].mxu0
        %v1943 = vadd.f32 %v1810, %v1942
        %v1944 = vpop.f32.mrb[0].mxu0
        %v1945 = vpop.f32.mrb[0].mxu0
        %v1946 = vadd.f32 %v1810, %v1945
        %v1947 = vpop.f32.mrb[0].mxu0
        %1948 = vmatprep.mubr.bf16.mxu0 0
        %1949 = vmatmul.mubr.bf16.gmra.mrb[0].mxu0 %v1780
        %v1950 = vpop.f32.mrb[0].mxu0
        %v1951 = vadd.f32 %v1810, %v1950
        %v1952 = vpop.f32.mrb[0].mxu0
        %v1953 = vpop.f32.mrb[0].mxu0
        %v1954 = vadd.f32 %v1810, %v1953
        %v1955 = vpop.f32.mrb[0].mxu0
        %1956 = vmatprep.mubr.bf16.mxu0 0
        %1957 = vmatmul.mubr.bf16.gmra.mrb[0].mxu0 %v1781
        %v1958 = vpop.f32.mrb[0].mxu0
        %v1959 = vadd.f32 %v1810, %v1958
        %v1960 = vpop.f32.mrb[0].mxu0
        %v1961 = vpop.f32.mrb[0].mxu0
        %v1962 = vadd.f32 %v1810, %v1961
        %v1963 = vpop.f32.mrb[0].mxu0
        %1964 = vmatprep.mubr.bf16.mxu0 0
        %1965 = vmatmul.mubr.bf16.gmra.mrb[0].mxu0 %v1782
        %v1966 = vpop.f32.mrb[0].mxu0
        %v1967 = vadd.f32 %v1810, %v1966
        %v1968 = vpop.f32.mrb[0].mxu0
        %v1969 = vpop.f32.mrb[0].mxu0
        %v1970 = vadd.f32 %v1810, %v1969
        %v1971 = vpop.f32.mrb[0].mxu0
        %1972 = vmatprep.mubr.bf16.mxu0 0
        %1973 = vmatmul.mubr.bf16.gmra.mrb[0].mxu0 %v1783
        %v1974 = vpop.f32.mrb[0].mxu0
        %v1975 = vadd.f32 %v1810, %v1974
        %v1976 = vpop.f32.mrb[0].mxu0
        %v1977 = vpop.f32.mrb[0].mxu0
        %v1978 = vadd.f32 %v1810, %v1977
        %v1979 = vpop.f32.mrb[0].mxu0
        %1980 = vmatprep.mubr.bf16.mxu0 0
        %1981 = vmatmul.mubr.bf16.gmra.mrb[0].mxu0 %v1784
        %v1982 = vpop.f32.mrb[0].mxu0
        %v1983 = vadd.f32 %v1810, %v1982
        %v1984 = vpop.f32.mrb[0].mxu0
        %v1985 = vpop.f32.mrb[0].mxu0
        %v1986 = vadd.f32 %v1810, %v1985
        %v1987 = vpop.f32.mrb[0].mxu0
        %1988 = vmatprep.mubr.bf16.mxu0 0
        %1989 = vmatmul.mubr.bf16.gmra.mrb[0].mxu0 %v1785
        %v1990 = vpop.f32.mrb[0].mxu0
        %v1991 = vadd.f32 %v1810, %v1990
        %v1992 = vpop.f32.mrb[0].mxu0
        %v1993 = vpop.f32.mrb[0].mxu0
        %v1994 = vadd.f32 %v1810, %v1993
        %v1995 = vpop.f32.mrb[0].mxu0
        %1996 = vmatprep.mubr.bf16.mxu0 0
        %1997 = vmatmul.mubr.bf16.gmra.mrb[0].mxu0 %v1786
        %v1998 = vpop.f32.mrb[0].mxu0
        %v1999 = vadd.f32 %v1810, %v1998
        %v2000 = vpop.f32.mrb[0].mxu0
        %v2001 = vpop.f32.mrb[0].mxu0
        %v2002 = vadd.f32 %v1810, %v2001
        %v2003 = vpop.f32.mrb[0].mxu0
        %2004 = vmatprep.mubr.bf16.mxu0 0
        %2005 = vmatmul.mubr.bf16.gmra.mrb[0].mxu0 %v1787
        %v2006 = vpop.f32.mrb[0].mxu0
        %v2007 = vadd.f32 %v1810, %v2006
        %v2008 = vpop.f32.mrb[0].mxu0
        %v2009 = vpop.f32.mrb[0].mxu0
        %v2010 = vadd.f32 %v1810, %v2009
        %v2011 = vpop.f32.mrb[0].mxu0
        %2012 = vmatprep.mubr.bf16.mxu0 0
        %2013 = vmatmul.mubr.bf16.gmra.mrb[0].mxu0 %v1788
        %v2014 = vpop.f32.mrb[0].mxu0
        %v2015 = vadd.f32 %v1810, %v2014
        %v2016 = vpop.f32.mrb[0].mxu0
        %v2017 = vpop.f32.mrb[0].mxu0
        %v2018 = vadd.f32 %v1810, %v2017
        %v2019 = vpop.f32.mrb[0].mxu0
        %2020 = vdwg.mxu0
        %v2021 = vmax.f32 %v1895, 0.0
        %v2022 = vmax.f32 %v1898, 0.0
        %v2023 = vmax.f32 %v1903, 0.0
        %v2024 = vmax.f32 %v1906, 0.0
        %v2025 = vmax.f32 %v1911, 0.0
        %v2026 = vmax.f32 %v1914, 0.0
        %v2027 = vmax.f32 %v1919, 0.0
        %v2028 = vmax.f32 %v1922, 0.0
        %v2029 = vmax.f32 %v1927, 0.0
        %v2030 = vmax.f32 %v1930, 0.0
        %v2031 = vmax.f32 %v1935, 0.0
        %v2032 = vmax.f32 %v1938, 0.0
        %v2033 = vmax.f32 %v1943, 0.0
        %v2034 = vmax.f32 %v1946, 0.0
        %v2035 = vmax.f32 %v1951, 0.0
        %v2036 = vmax.f32 %v1954, 0.0
        %v2037 = vmax.f32 %v1959, 0.0
        %v2038 = vmax.f32 %v1962, 0.0
        %v2039 = vmax.f32 %v1967, 0.0
        %v2040 = vmax.f32 %v1970, 0.0
        %v2041 = vmax.f32 %v1975, 0.0
        %v2042 = vmax.f32 %v1978, 0.0
        %v2043 = vmax.f32 %v1983, 0.0
        %v2044 = vmax.f32 %v1986, 0.0
        %v2045 = vmax.f32 %v1991, 0.0
        %v2046 = vmax.f32 %v1994, 0.0
        %v2047 = vmax.f32 %v1999, 0.0
        %v2048 = vmax.f32 %v2002, 0.0
        %v2049 = vmax.f32 %v2007, 0.0
        %v2050 = vmax.f32 %v2010, 0.0
        %v2051 = vmax.f32 %v2015, 0.0
        %v2052 = vmax.f32 %v2018, 0.0
        %v2053 = vpack.c.bf16 %v2022, %v2021
        %v2054 = vpack.c.bf16 %v2024, %v2023
        %v2055 = vpack.c.bf16 %v2026, %v2025
        %v2056 = vpack.c.bf16 %v2028, %v2027
        %v2057 = vpack.c.bf16 %v2030, %v2029
        %v2058 = vpack.c.bf16 %v2032, %v2031
        %v2059 = vpack.c.bf16 %v2034, %v2033
        %v2060 = vpack.c.bf16 %v2036, %v2035
        %v2061 = vpack.c.bf16 %v2038, %v2037
        %v2062 = vpack.c.bf16 %v2040, %v2039
        %v2063 = vpack.c.bf16 %v2042, %v2041
        %v2064 = vpack.c.bf16 %v2044, %v2043
        %v2065 = vpack.c.bf16 %v2046, %v2045
        %v2066 = vpack.c.bf16 %v2048, %v2047
        %v2067 = vpack.c.bf16 %v2050, %v2049
        %v2068 = vpack.c.bf16 %v2052, %v2051
        %v2069 = vld [vmem:[%s5] sm:$0xf]
        %v2070 = vld [vmem:[%s5 + $0x4] sm:$0xf]
        %v2071 = vld [vmem:[%s5 + $0x8] sm:$0xf]
        %v2072 = vld [vmem:[%s5 + $0xc] sm:$0xf]
        %v2073 = vld [vmem:[%s5 + $0x10] sm:$0xf]
        %v2074 = vld [vmem:[%s5 + $0x14] sm:$0xf]
        %v2075 = vld [vmem:[%s5 + $0x18] sm:$0xf]
        %v2076 = vld [vmem:[%s5 + $0x1c] sm:$0xf]
        %v2077 = vld [vmem:[%s5 + $0x20] sm:$0xf]
        %v2078 = vld [vmem:[%s5 + $0x24] sm:$0xf]
        %v2079 = vld [vmem:[%s5 + $0x28] sm:$0xf]
        %v2080 = vld [vmem:[%s5 + $0x2c] sm:$0xf]
        %v2081 = vld [vmem:[%s5 + $0x30] sm:$0xf]
        %v2082 = vld [vmem:[%s5 + $0x34] sm:$0xf]
        %v2083 = vld [vmem:[%s5 + $0x38] sm:$0xf]
        %v2084 = vld [vmem:[%s5 + $0x3c] sm:$0xf]
        %v2085 = vld [vmem:[%s6] sm:$0x1]
        %v2087 = vlaneseq
        %v2088 = vshrl.u32 %v2087, 7
        %v2089 = vsub.s32 0, %v2088
        %v2090 = vrot.slane %v2085, %v2089
        %v2108 = vunpack.c.l.b16 %v2069
        %v2109 = vunpack.c.l.b16 %v2070
        %v2110 = vunpack.c.l.b16 %v2071
        %v2111 = vunpack.c.l.b16 %v2072
        %v2112 = vunpack.c.l.b16 %v2073
        %v2113 = vunpack.c.l.b16 %v2074
        %v2114 = vunpack.c.l.b16 %v2075
        %v2115 = vunpack.c.l.b16 %v2076
        %v2116 = vunpack.c.l.b16 %v2077
        %v2117 = vunpack.c.l.b16 %v2078
        %v2118 = vunpack.c.l.b16 %v2079
        %v2119 = vunpack.c.l.b16 %v2080
        %v2120 = vunpack.c.l.b16 %v2081
        %v2121 = vunpack.c.l.b16 %v2082
        %v2122 = vunpack.c.l.b16 %v2083
        %v2123 = vunpack.c.l.b16 %v2084
        %v2124 = vpack.c.b16 %v2109, %v2108
        %v2125 = vpack.c.b16 %v2111, %v2110
        %v2126 = vpack.c.b16 %v2113, %v2112
        %v2127 = vpack.c.b16 %v2115, %v2114
        %v2128 = vpack.c.b16 %v2117, %v2116
        %v2129 = vpack.c.b16 %v2119, %v2118
        %v2130 = vpack.c.b16 %v2121, %v2120
        %v2131 = vpack.c.b16 %v2123, %v2122
        %2140 = vmatprep.subr.bf16.mxu0 0
        %2141 = vmatpush1.bf16.msra.mxu0 %v2124
        %2142 = vmatprep.subr.bf16.mxu0 0
        %2143 = vmatpush1.bf16.msra.mxu0 %v2125
        %2144 = vmatprep.subr.bf16.mxu0 0
        %2145 = vmatpush1.bf16.msra.mxu0 %v2126
        %2146 = vmatprep.subr.bf16.mxu0 0
        %2147 = vmatpush1.bf16.msra.mxu0 %v2127
        %2148 = vmatprep.subr.bf16.mxu0 0
        %2149 = vmatpush1.bf16.msra.mxu0 %v2128
        %2150 = vmatprep.subr.bf16.mxu0 0
        %2151 = vmatpush1.bf16.msra.mxu0 %v2129
        %2152 = vmatprep.subr.bf16.mxu0 0
        %2153 = vmatpush1.bf16.msra.mxu0 %v2130
        %2154 = vmatprep.subr.bf16.mxu0 0
        %2155 = vmatpush1.bf16.msra.mxu0 %v2131
        %2156 = vmatprep.subr.bf16.mxu0 0
        %2157 = vmatpush1.bf16.msra.mxu0 0
        %2158 = vmatprep.subr.bf16.mxu0 0
        %2159 = vmatpush1.bf16.msra.mxu0 0
        %2160 = vmatprep.subr.bf16.mxu0 0
        %2161 = vmatpush1.bf16.msra.mxu0 0
        %2162 = vmatprep.subr.bf16.mxu0 0
        %2163 = vmatpush1.bf16.msra.mxu0 0
        %2164 = vmatprep.subr.bf16.mxu0 0
        %2165 = vmatpush1.bf16.msra.mxu0 0
        %2166 = vmatprep.subr.bf16.mxu0 0
        %2167 = vmatpush1.bf16.msra.mxu0 0
        %2168 = vmatprep.subr.bf16.mxu0 0
        %2169 = vmatpush1.bf16.msra.mxu0 0
        %2170 = vmatprep.subr.bf16.mxu0 0
        %2171 = vmatpush1.bf16.msra.mxu0 0
        %2172 = vmatprep.mubr.bf16.mxu0 0
        %2173 = vmatmul.mubr.bf16.gmra.mrb[0].mxu0 %v2053
        %v2174 = vpop.f32.mrb[0].mxu0
        %v2175 = vadd.f32 %v2090, %v2174
        %v2176 = vpop.f32.mrb[0].mxu0
        %v2177 = vpop.f32.mrb[0].mxu0
        %v2178 = vadd.f32 %v2090, %v2177
        %v2179 = vpop.f32.mrb[0].mxu0
        %2180 = vmatprep.mubr.bf16.mxu0 0
        %2181 = vmatmul.mubr.bf16.gmra.mrb[0].mxu0 %v2054
        %v2182 = vpop.f32.mrb[0].mxu0
        %v2183 = vadd.f32 %v2090, %v2182
        %v2184 = vpop.f32.mrb[0].mxu0
        %v2185 = vpop.f32.mrb[0].mxu0
        %v2186 = vadd.f32 %v2090, %v2185
        %v2187 = vpop.f32.mrb[0].mxu0
        %2188 = vmatprep.mubr.bf16.mxu0 0
        %2189 = vmatmul.mubr.bf16.gmra.mrb[0].mxu0 %v2055
        %v2190 = vpop.f32.mrb[0].mxu0
        %v2191 = vadd.f32 %v2090, %v2190
        %v2192 = vpop.f32.mrb[0].mxu0
        %v2193 = vpop.f32.mrb[0].mxu0
        %v2194 = vadd.f32 %v2090, %v2193
        %v2195 = vpop.f32.mrb[0].mxu0
        %2196 = vmatprep.mubr.bf16.mxu0 0
        %2197 = vmatmul.mubr.bf16.gmra.mrb[0].mxu0 %v2056
        %v2198 = vpop.f32.mrb[0].mxu0
        %v2199 = vadd.f32 %v2090, %v2198
        %v2200 = vpop.f32.mrb[0].mxu0
        %v2201 = vpop.f32.mrb[0].mxu0
        %v2202 = vadd.f32 %v2090, %v2201
        %v2203 = vpop.f32.mrb[0].mxu0
        %2204 = vmatprep.mubr.bf16.mxu0 0
        %2205 = vmatmul.mubr.bf16.gmra.mrb[0].mxu0 %v2057
        %v2206 = vpop.f32.mrb[0].mxu0
        %v2207 = vadd.f32 %v2090, %v2206
        %v2208 = vpop.f32.mrb[0].mxu0
        %v2209 = vpop.f32.mrb[0].mxu0
        %v2210 = vadd.f32 %v2090, %v2209
        %v2211 = vpop.f32.mrb[0].mxu0
        %2212 = vmatprep.mubr.bf16.mxu0 0
        %2213 = vmatmul.mubr.bf16.gmra.mrb[0].mxu0 %v2058
        %v2214 = vpop.f32.mrb[0].mxu0
        %v2215 = vadd.f32 %v2090, %v2214
        %v2216 = vpop.f32.mrb[0].mxu0
        %v2217 = vpop.f32.mrb[0].mxu0
        %v2218 = vadd.f32 %v2090, %v2217
        %v2219 = vpop.f32.mrb[0].mxu0
        %2220 = vmatprep.mubr.bf16.mxu0 0
        %2221 = vmatmul.mubr.bf16.gmra.mrb[0].mxu0 %v2059
        %v2222 = vpop.f32.mrb[0].mxu0
        %v2223 = vadd.f32 %v2090, %v2222
        %v2224 = vpop.f32.mrb[0].mxu0
        %v2225 = vpop.f32.mrb[0].mxu0
        %v2226 = vadd.f32 %v2090, %v2225
        %v2227 = vpop.f32.mrb[0].mxu0
        %2228 = vmatprep.mubr.bf16.mxu0 0
        %2229 = vmatmul.mubr.bf16.gmra.mrb[0].mxu0 %v2060
        %v2230 = vpop.f32.mrb[0].mxu0
        %v2231 = vadd.f32 %v2090, %v2230
        %v2232 = vpop.f32.mrb[0].mxu0
        %v2233 = vpop.f32.mrb[0].mxu0
        %v2234 = vadd.f32 %v2090, %v2233
        %v2235 = vpop.f32.mrb[0].mxu0
        %2236 = vmatprep.mubr.bf16.mxu0 0
        %2237 = vmatmul.mubr.bf16.gmra.mrb[0].mxu0 %v2061
        %v2238 = vpop.f32.mrb[0].mxu0
        %v2239 = vadd.f32 %v2090, %v2238
        %v2240 = vpop.f32.mrb[0].mxu0
        %v2241 = vpop.f32.mrb[0].mxu0
        %v2242 = vadd.f32 %v2090, %v2241
        %v2243 = vpop.f32.mrb[0].mxu0
        %2244 = vmatprep.mubr.bf16.mxu0 0
        %2245 = vmatmul.mubr.bf16.gmra.mrb[0].mxu0 %v2062
        %v2246 = vpop.f32.mrb[0].mxu0
        %v2247 = vadd.f32 %v2090, %v2246
        %v2248 = vpop.f32.mrb[0].mxu0
        %v2249 = vpop.f32.mrb[0].mxu0
        %v2250 = vadd.f32 %v2090, %v2249
        %v2251 = vpop.f32.mrb[0].mxu0
        %2252 = vmatprep.mubr.bf16.mxu0 0
        %2253 = vmatmul.mubr.bf16.gmra.mrb[0].mxu0 %v2063
        %v2254 = vpop.f32.mrb[0].mxu0
        %v2255 = vadd.f32 %v2090, %v2254
        %v2256 = vpop.f32.mrb[0].mxu0
        %v2257 = vpop.f32.mrb[0].mxu0
        %v2258 = vadd.f32 %v2090, %v2257
        %v2259 = vpop.f32.mrb[0].mxu0
        %2260 = vmatprep.mubr.bf16.mxu0 0
        %2261 = vmatmul.mubr.bf16.gmra.mrb[0].mxu0 %v2064
        %v2262 = vpop.f32.mrb[0].mxu0
        %v2263 = vadd.f32 %v2090, %v2262
        %v2264 = vpop.f32.mrb[0].mxu0
        %v2265 = vpop.f32.mrb[0].mxu0
        %v2266 = vadd.f32 %v2090, %v2265
        %v2267 = vpop.f32.mrb[0].mxu0
        %2268 = vmatprep.mubr.bf16.mxu0 0
        %2269 = vmatmul.mubr.bf16.gmra.mrb[0].mxu0 %v2065
        %v2270 = vpop.f32.mrb[0].mxu0
        %v2271 = vadd.f32 %v2090, %v2270
        %v2272 = vpop.f32.mrb[0].mxu0
        %v2273 = vpop.f32.mrb[0].mxu0
        %v2274 = vadd.f32 %v2090, %v2273
        %v2275 = vpop.f32.mrb[0].mxu0
        %2276 = vmatprep.mubr.bf16.mxu0 0
        %2277 = vmatmul.mubr.bf16.gmra.mrb[0].mxu0 %v2066
        %v2278 = vpop.f32.mrb[0].mxu0
        %v2279 = vadd.f32 %v2090, %v2278
        %v2280 = vpop.f32.mrb[0].mxu0
        %v2281 = vpop.f32.mrb[0].mxu0
        %v2282 = vadd.f32 %v2090, %v2281
        %v2283 = vpop.f32.mrb[0].mxu0
        %2284 = vmatprep.mubr.bf16.mxu0 0
        %2285 = vmatmul.mubr.bf16.gmra.mrb[0].mxu0 %v2067
        %v2286 = vpop.f32.mrb[0].mxu0
        %v2287 = vadd.f32 %v2090, %v2286
        %v2288 = vpop.f32.mrb[0].mxu0
        %v2289 = vpop.f32.mrb[0].mxu0
        %v2290 = vadd.f32 %v2090, %v2289
        %v2291 = vpop.f32.mrb[0].mxu0
        %2292 = vmatprep.mubr.bf16.mxu0 0
        %2293 = vmatmul.mubr.bf16.gmra.mrb[0].mxu0 %v2068
        %v2294 = vpop.f32.mrb[0].mxu0
        %v2295 = vadd.f32 %v2090, %v2294
        %v2296 = vpop.f32.mrb[0].mxu0
        %v2297 = vpop.f32.mrb[0].mxu0
        %v2298 = vadd.f32 %v2090, %v2297
        %v2299 = vpop.f32.mrb[0].mxu0
        %2300 = vdwg.mxu0
        %2301 = vmax.xlane.f32.xlu0 %v2175
        %v2302 = vpop.xlane.xlu0 %2301
        %2303 = vmax.xlane.f32.xlu0 %v2178
        %v2304 = vpop.xlane.xlu0 %2303
        %2305 = vmax.xlane.f32.xlu0 %v2183
        %v2306 = vpop.xlane.xlu0 %2305
        %2307 = vmax.xlane.f32.xlu0 %v2186
        %v2308 = vpop.xlane.xlu0 %2307
        %2309 = vmax.xlane.f32.xlu0 %v2191
        %v2310 = vpop.xlane.xlu0 %2309
        %2311 = vmax.xlane.f32.xlu0 %v2194
        %v2312 = vpop.xlane.xlu0 %2311
        %2313 = vmax.xlane.f32.xlu0 %v2199
        %v2314 = vpop.xlane.xlu0 %2313
        %2315 = vmax.xlane.f32.xlu0 %v2202
        %v2316 = vpop.xlane.xlu0 %2315
        %2317 = vmax.xlane.f32.xlu0 %v2207
        %v2318 = vpop.xlane.xlu0 %2317
        %2319 = vmax.xlane.f32.xlu0 %v2210
        %v2320 = vpop.xlane.xlu0 %2319
        %2321 = vmax.xlane.f32.xlu0 %v2215
        %v2322 = vpop.xlane.xlu0 %2321
        %2323 = vmax.xlane.f32.xlu0 %v2218
        %v2324 = vpop.xlane.xlu0 %2323
        %2325 = vmax.xlane.f32.xlu0 %v2223
        %v2326 = vpop.xlane.xlu0 %2325
        %2327 = vmax.xlane.f32.xlu0 %v2226
        %v2328 = vpop.xlane.xlu0 %2327
        %2329 = vmax.xlane.f32.xlu0 %v2231
        %v2330 = vpop.xlane.xlu0 %2329
        %2331 = vmax.xlane.f32.xlu0 %v2234
        %v2332 = vpop.xlane.xlu0 %2331
        %2333 = vmax.xlane.f32.xlu0 %v2239
        %v2334 = vpop.xlane.xlu0 %2333
        %2335 = vmax.xlane.f32.xlu0 %v2242
        %v2336 = vpop.xlane.xlu0 %2335
        %2337 = vmax.xlane.f32.xlu0 %v2247
        %v2338 = vpop.xlane.xlu0 %2337
        %2339 = vmax.xlane.f32.xlu0 %v2250
        %v2340 = vpop.xlane.xlu0 %2339
        %2341 = vmax.xlane.f32.xlu0 %v2255
        %v2342 = vpop.xlane.xlu0 %2341
        %2343 = vmax.xlane.f32.xlu0 %v2258
        %v2344 = vpop.xlane.xlu0 %2343
        %2345 = vmax.xlane.f32.xlu0 %v2263
        %v2346 = vpop.xlane.xlu0 %2345
        %2347 = vmax.xlane.f32.xlu0 %v2266
        %v2348 = vpop.xlane.xlu0 %2347
        %2349 = vmax.xlane.f32.xlu0 %v2271
        %v2350 = vpop.xlane.xlu0 %2349
        %2351 = vmax.xlane.f32.xlu0 %v2274
        %v2352 = vpop.xlane.xlu0 %2351
        %2353 = vmax.xlane.f32.xlu0 %v2279
        %v2354 = vpop.xlane.xlu0 %2353
        %2355 = vmax.xlane.f32.xlu0 %v2282
        %v2356 = vpop.xlane.xlu0 %2355
        %2357 = vmax.xlane.f32.xlu0 %v2287
        %v2358 = vpop.xlane.xlu0 %2357
        %2359 = vmax.xlane.f32.xlu0 %v2290
        %v2360 = vpop.xlane.xlu0 %2359
        %2361 = vmax.xlane.f32.xlu0 %v2295
        %v2362 = vpop.xlane.xlu0 %2361
        %2363 = vmax.xlane.f32.xlu0 %v2298
        %v2364 = vpop.xlane.xlu0 %2363
        %v2365 = vsub.f32 %v2175, %v2302
        %v2366 = vsub.f32 %v2178, %v2304
        %v2367 = vsub.f32 %v2183, %v2306
        %v2368 = vsub.f32 %v2186, %v2308
        %v2369 = vsub.f32 %v2191, %v2310
        %v2370 = vsub.f32 %v2194, %v2312
        %v2371 = vsub.f32 %v2199, %v2314
        %v2372 = vsub.f32 %v2202, %v2316
        %v2373 = vsub.f32 %v2207, %v2318
        %v2374 = vsub.f32 %v2210, %v2320
        %v2375 = vsub.f32 %v2215, %v2322
        %v2376 = vsub.f32 %v2218, %v2324
        %v2377 = vsub.f32 %v2223, %v2326
        %v2378 = vsub.f32 %v2226, %v2328
        %v2379 = vsub.f32 %v2231, %v2330
        %v2380 = vsub.f32 %v2234, %v2332
        %v2381 = vsub.f32 %v2239, %v2334
        %v2382 = vsub.f32 %v2242, %v2336
        %v2383 = vsub.f32 %v2247, %v2338
        %v2384 = vsub.f32 %v2250, %v2340
        %v2385 = vsub.f32 %v2255, %v2342
        %v2386 = vsub.f32 %v2258, %v2344
        %v2387 = vsub.f32 %v2263, %v2346
        %v2388 = vsub.f32 %v2266, %v2348
        %v2389 = vsub.f32 %v2271, %v2350
        %v2390 = vsub.f32 %v2274, %v2352
        %v2391 = vsub.f32 %v2279, %v2354
        %v2392 = vsub.f32 %v2282, %v2356
        %v2393 = vsub.f32 %v2287, %v2358
        %v2394 = vsub.f32 %v2290, %v2360
        %v2395 = vsub.f32 %v2295, %v2362
        %v2396 = vsub.f32 %v2298, %v2364
        %v2397 = vmul.f32 %v2365, 1.442695
        %v2398 = vpow.pop %v2397
        %v2399 = vmul.f32 %v2366, 1.442695
        %v2400 = vpow.pop %v2399
        %v2401 = vmul.f32 %v2367, 1.442695
        %v2402 = vpow.pop %v2401
        %v2403 = vmul.f32 %v2368, 1.442695
        %v2404 = vpow.pop %v2403
        %v2405 = vmul.f32 %v2369, 1.442695
        %v2406 = vpow.pop %v2405
        %v2407 = vmul.f32 %v2370, 1.442695
        %v2408 = vpow.pop %v2407
        %v2409 = vmul.f32 %v2371, 1.442695
        %v2410 = vpow.pop %v2409
        %v2411 = vmul.f32 %v2372, 1.442695
        %v2412 = vpow.pop %v2411
        %v2413 = vmul.f32 %v2373, 1.442695
        %v2414 = vpow.pop %v2413
        %v2415 = vmul.f32 %v2374, 1.442695
        %v2416 = vpow.pop %v2415
        %v2417 = vmul.f32 %v2375, 1.442695
        %v2418 = vpow.pop %v2417
        %v2419 = vmul.f32 %v2376, 1.442695
        %v2420 = vpow.pop %v2419
        %v2421 = vmul.f32 %v2377, 1.442695
        %v2422 = vpow.pop %v2421
        %v2423 = vmul.f32 %v2378, 1.442695
        %v2424 = vpow.pop %v2423
        %v2425 = vmul.f32 %v2379, 1.442695
        %v2426 = vpow.pop %v2425
        %v2427 = vmul.f32 %v2380, 1.442695
        %v2428 = vpow.pop %v2427
        %v2429 = vmul.f32 %v2381, 1.442695
        %v2430 = vpow.pop %v2429
        %v2431 = vmul.f32 %v2382, 1.442695
        %v2432 = vpow.pop %v2431
        %v2433 = vmul.f32 %v2383, 1.442695
        %v2434 = vpow.pop %v2433
        %v2435 = vmul.f32 %v2384, 1.442695
        %v2436 = vpow.pop %v2435
        %v2437 = vmul.f32 %v2385, 1.442695
        %v2438 = vpow.pop %v2437
        %v2439 = vmul.f32 %v2386, 1.442695
        %v2440 = vpow.pop %v2439
        %v2441 = vmul.f32 %v2387, 1.442695
        %v2442 = vpow.pop %v2441
        %v2443 = vmul.f32 %v2388, 1.442695
        %v2444 = vpow.pop %v2443
        %v2445 = vmul.f32 %v2389, 1.442695
        %v2446 = vpow.pop %v2445
        %v2447 = vmul.f32 %v2390, 1.442695
        %v2448 = vpow.pop %v2447
        %v2449 = vmul.f32 %v2391, 1.442695
        %v2450 = vpow.pop %v2449
        %v2451 = vmul.f32 %v2392, 1.442695
        %v2452 = vpow.pop %v2451
        %v2453 = vmul.f32 %v2393, 1.442695
        %v2454 = vpow.pop %v2453
        %v2455 = vmul.f32 %v2394, 1.442695
        %v2456 = vpow.pop %v2455
        %v2457 = vmul.f32 %v2395, 1.442695
        %v2458 = vpow.pop %v2457
        %v2459 = vmul.f32 %v2396, 1.442695
        %v2460 = vpow.pop %v2459
        %2461 = vadd.xlane.f32.xlu0 %v2398
        %v2462 = vpop.xlane.xlu0 %2461
        %2463 = vadd.xlane.f32.xlu0 %v2400
        %v2464 = vpop.xlane.xlu0 %2463
        %2465 = vadd.xlane.f32.xlu0 %v2402
        %v2466 = vpop.xlane.xlu0 %2465
        %2467 = vadd.xlane.f32.xlu0 %v2404
        %v2468 = vpop.xlane.xlu0 %2467
        %2469 = vadd.xlane.f32.xlu0 %v2406
        %v2470 = vpop.xlane.xlu0 %2469
        %2471 = vadd.xlane.f32.xlu0 %v2408
        %v2472 = vpop.xlane.xlu0 %2471
        %2473 = vadd.xlane.f32.xlu0 %v2410
        %v2474 = vpop.xlane.xlu0 %2473
        %2475 = vadd.xlane.f32.xlu0 %v2412
        %v2476 = vpop.xlane.xlu0 %2475
        %2477 = vadd.xlane.f32.xlu0 %v2414
        %v2478 = vpop.xlane.xlu0 %2477
        %2479 = vadd.xlane.f32.xlu0 %v2416
        %v2480 = vpop.xlane.xlu0 %2479
        %2481 = vadd.xlane.f32.xlu0 %v2418
        %v2482 = vpop.xlane.xlu0 %2481
        %2483 = vadd.xlane.f32.xlu0 %v2420
        %v2484 = vpop.xlane.xlu0 %2483
        %2485 = vadd.xlane.f32.xlu0 %v2422
        %v2486 = vpop.xlane.xlu0 %2485
        %2487 = vadd.xlane.f32.xlu0 %v2424
        %v2488 = vpop.xlane.xlu0 %2487
        %2489 = vadd.xlane.f32.xlu0 %v2426
        %v2490 = vpop.xlane.xlu0 %2489
        %2491 = vadd.xlane.f32.xlu0 %v2428
        %v2492 = vpop.xlane.xlu0 %2491
        %2493 = vadd.xlane.f32.xlu0 %v2430
        %v2494 = vpop.xlane.xlu0 %2493
        %2495 = vadd.xlane.f32.xlu0 %v2432
        %v2496 = vpop.xlane.xlu0 %2495
        %2497 = vadd.xlane.f32.xlu0 %v2434
        %v2498 = vpop.xlane.xlu0 %2497
        %2499 = vadd.xlane.f32.xlu0 %v2436
        %v2500 = vpop.xlane.xlu0 %2499
        %2501 = vadd.xlane.f32.xlu0 %v2438
        %v2502 = vpop.xlane.xlu0 %2501
        %2503 = vadd.xlane.f32.xlu0 %v2440
        %v2504 = vpop.xlane.xlu0 %2503
        %2505 = vadd.xlane.f32.xlu0 %v2442
        %v2506 = vpop.xlane.xlu0 %2505
        %2507 = vadd.xlane.f32.xlu0 %v2444
        %v2508 = vpop.xlane.xlu0 %2507
        %2509 = vadd.xlane.f32.xlu0 %v2446
        %v2510 = vpop.xlane.xlu0 %2509
        %2511 = vadd.xlane.f32.xlu0 %v2448
        %v2512 = vpop.xlane.xlu0 %2511
        %2513 = vadd.xlane.f32.xlu0 %v2450
        %v2514 = vpop.xlane.xlu0 %2513
        %2515 = vadd.xlane.f32.xlu0 %v2452
        %v2516 = vpop.xlane.xlu0 %2515
        %2517 = vadd.xlane.f32.xlu0 %v2454
        %v2518 = vpop.xlane.xlu0 %2517
        %2519 = vadd.xlane.f32.xlu0 %v2456
        %v2520 = vpop.xlane.xlu0 %2519
        %2521 = vadd.xlane.f32.xlu0 %v2458
        %v2522 = vpop.xlane.xlu0 %2521
        %2523 = vadd.xlane.f32.xlu0 %v2460
        %v2524 = vpop.xlane.xlu0 %2523
        %v2525 = vrcp.pop %v2462
        %v2526 = vmul.f32 %v2398, %v2525
        %v2527 = vrcp.pop %v2464
        %v2528 = vmul.f32 %v2400, %v2527
        %v2529 = vrcp.pop %v2466
        %v2530 = vmul.f32 %v2402, %v2529
        %v2531 = vrcp.pop %v2468
        %v2532 = vmul.f32 %v2404, %v2531
        %v2533 = vrcp.pop %v2470
        %v2534 = vmul.f32 %v2406, %v2533
        %v2535 = vrcp.pop %v2472
        %v2536 = vmul.f32 %v2408, %v2535
        %v2537 = vrcp.pop %v2474
        %v2538 = vmul.f32 %v2410, %v2537
        %v2539 = vrcp.pop %v2476
        %v2540 = vmul.f32 %v2412, %v2539
        %v2541 = vrcp.pop %v2478
        %v2542 = vmul.f32 %v2414, %v2541
        %v2543 = vrcp.pop %v2480
        %v2544 = vmul.f32 %v2416, %v2543
        %v2545 = vrcp.pop %v2482
        %v2546 = vmul.f32 %v2418, %v2545
        %v2547 = vrcp.pop %v2484
        %v2548 = vmul.f32 %v2420, %v2547
        %v2549 = vrcp.pop %v2486
        %v2550 = vmul.f32 %v2422, %v2549
        %v2551 = vrcp.pop %v2488
        %v2552 = vmul.f32 %v2424, %v2551
        %v2553 = vrcp.pop %v2490
        %v2554 = vmul.f32 %v2426, %v2553
        %v2555 = vrcp.pop %v2492
        %v2556 = vmul.f32 %v2428, %v2555
        %v2557 = vrcp.pop %v2494
        %v2558 = vmul.f32 %v2430, %v2557
        %v2559 = vrcp.pop %v2496
        %v2560 = vmul.f32 %v2432, %v2559
        %v2561 = vrcp.pop %v2498
        %v2562 = vmul.f32 %v2434, %v2561
        %v2563 = vrcp.pop %v2500
        %v2564 = vmul.f32 %v2436, %v2563
        %v2565 = vrcp.pop %v2502
        %v2566 = vmul.f32 %v2438, %v2565
        %v2567 = vrcp.pop %v2504
        %v2568 = vmul.f32 %v2440, %v2567
        %v2569 = vrcp.pop %v2506
        %v2570 = vmul.f32 %v2442, %v2569
        %v2571 = vrcp.pop %v2508
        %v2572 = vmul.f32 %v2444, %v2571
        %v2573 = vrcp.pop %v2510
        %v2574 = vmul.f32 %v2446, %v2573
        %v2575 = vrcp.pop %v2512
        %v2576 = vmul.f32 %v2448, %v2575
        %v2577 = vrcp.pop %v2514
        %v2578 = vmul.f32 %v2450, %v2577
        %v2579 = vrcp.pop %v2516
        %v2580 = vmul.f32 %v2452, %v2579
        %v2581 = vrcp.pop %v2518
        %v2582 = vmul.f32 %v2454, %v2581
        %v2583 = vrcp.pop %v2520
        %v2584 = vmul.f32 %v2456, %v2583
        %v2585 = vrcp.pop %v2522
        %v2586 = vmul.f32 %v2458, %v2585
        %v2587 = vrcp.pop %v2524
        %v2588 = vmul.f32 %v2460, %v2587
        %v2589 = vpack.c.bf16 %v2528, %v2526
        %v2590 = vpack.c.bf16 %v2532, %v2530
        %v2591 = vpack.c.bf16 %v2536, %v2534
        %v2592 = vpack.c.bf16 %v2540, %v2538
        %v2593 = vpack.c.bf16 %v2544, %v2542
        %v2594 = vpack.c.bf16 %v2548, %v2546
        %v2595 = vpack.c.bf16 %v2552, %v2550
        %v2596 = vpack.c.bf16 %v2556, %v2554
        %v2597 = vpack.c.bf16 %v2560, %v2558
        %v2598 = vpack.c.bf16 %v2564, %v2562
        %v2599 = vpack.c.bf16 %v2568, %v2566
        %v2600 = vpack.c.bf16 %v2572, %v2570
        %v2601 = vpack.c.bf16 %v2576, %v2574
        %v2602 = vpack.c.bf16 %v2580, %v2578
        %v2603 = vpack.c.bf16 %v2584, %v2582
        %v2604 = vpack.c.bf16 %v2588, %v2586
        %v2621 = vunpack.c.l.b16 %v2589
        %v2622 = vunpack.c.h.b16 %v2589
        %v2623 = vunpack.c.l.b16 %v2590
        %v2624 = vunpack.c.h.b16 %v2590
        %v2625 = vunpack.c.l.b16 %v2591
        %v2626 = vunpack.c.h.b16 %v2591
        %v2627 = vunpack.c.l.b16 %v2592
        %v2628 = vunpack.c.h.b16 %v2592
        %v2629 = vunpack.c.l.b16 %v2593
        %v2630 = vunpack.c.h.b16 %v2593
        %v2631 = vunpack.c.l.b16 %v2594
        %v2632 = vunpack.c.h.b16 %v2594
        %v2633 = vunpack.c.l.b16 %v2595
        %v2634 = vunpack.c.h.b16 %v2595
        %v2635 = vunpack.c.l.b16 %v2596
        %v2636 = vunpack.c.h.b16 %v2596
        %v2637 = vunpack.c.l.b16 %v2597
        %v2638 = vunpack.c.h.b16 %v2597
        %v2639 = vunpack.c.l.b16 %v2598
        %v2640 = vunpack.c.h.b16 %v2598
        %v2641 = vunpack.c.l.b16 %v2599
        %v2642 = vunpack.c.h.b16 %v2599
        %v2643 = vunpack.c.l.b16 %v2600
        %v2644 = vunpack.c.h.b16 %v2600
        %v2645 = vunpack.c.l.b16 %v2601
        %v2646 = vunpack.c.h.b16 %v2601
        %v2647 = vunpack.c.l.b16 %v2602
        %v2648 = vunpack.c.h.b16 %v2602
        %v2649 = vunpack.c.l.b16 %v2603
        %v2650 = vunpack.c.h.b16 %v2603
        %v2651 = vunpack.c.l.b16 %v2604
        %v2652 = vunpack.c.h.b16 %v2604
        %v2653 = vpack.c.b16 %v2621, %v2621
        %v2654 = vpack.c.b16 %v2622, %v2622
        %v2655 = vpack.c.b16 %v2623, %v2623
        %v2656 = vpack.c.b16 %v2624, %v2624
        %v2657 = vpack.c.b16 %v2625, %v2625
        %v2658 = vpack.c.b16 %v2626, %v2626
        %v2659 = vpack.c.b16 %v2627, %v2627
        %v2660 = vpack.c.b16 %v2628, %v2628
        %v2661 = vpack.c.b16 %v2629, %v2629
        %v2662 = vpack.c.b16 %v2630, %v2630
        %v2663 = vpack.c.b16 %v2631, %v2631
        %v2664 = vpack.c.b16 %v2632, %v2632
        %v2665 = vpack.c.b16 %v2633, %v2633
        %v2666 = vpack.c.b16 %v2634, %v2634
        %v2667 = vpack.c.b16 %v2635, %v2635
        %v2668 = vpack.c.b16 %v2636, %v2636
        %v2669 = vpack.c.b16 %v2637, %v2637
        %v2670 = vpack.c.b16 %v2638, %v2638
        %v2671 = vpack.c.b16 %v2639, %v2639
        %v2672 = vpack.c.b16 %v2640, %v2640
        %v2673 = vpack.c.b16 %v2641, %v2641
        %v2674 = vpack.c.b16 %v2642, %v2642
        %v2675 = vpack.c.b16 %v2643, %v2643
        %v2676 = vpack.c.b16 %v2644, %v2644
        %v2677 = vpack.c.b16 %v2645, %v2645
        %v2678 = vpack.c.b16 %v2646, %v2646
        %v2679 = vpack.c.b16 %v2647, %v2647
        %v2680 = vpack.c.b16 %v2648, %v2648
        %v2681 = vpack.c.b16 %v2649, %v2649
        %v2682 = vpack.c.b16 %v2650, %v2650
        %v2683 = vpack.c.b16 %v2651, %v2651
        %v2684 = vpack.c.b16 %v2652, %v2652
        %2717 = vst [vmem:[%s289] sm:$0xf] %v2653
        %2718 = vst [vmem:[%s289 + $0x4] sm:$0xf] %v2654
        %2719 = vst [vmem:[%s289 + $0x8] sm:$0xf] %v2655
        %2720 = vst [vmem:[%s289 + $0xc] sm:$0xf] %v2656
        %2721 = vst [vmem:[%s289 + $0x10] sm:$0xf] %v2657
        %2722 = vst [vmem:[%s289 + $0x14] sm:$0xf] %v2658
        %2723 = vst [vmem:[%s289 + $0x18] sm:$0xf] %v2659
        %2724 = vst [vmem:[%s289 + $0x1c] sm:$0xf] %v2660
        %2725 = vst [vmem:[%s289 + $0x20] sm:$0xf] %v2661
        %2726 = vst [vmem:[%s289 + $0x24] sm:$0xf] %v2662
        %2727 = vst [vmem:[%s289 + $0x28] sm:$0xf] %v2663
        %2728 = vst [vmem:[%s289 + $0x2c] sm:$0xf] %v2664
        %2729 = vst [vmem:[%s289 + $0x30] sm:$0xf] %v2665
        %2730 = vst [vmem:[%s289 + $0x34] sm:$0xf] %v2666
        %2731 = vst [vmem:[%s289 + $0x38] sm:$0xf] %v2667
        %2732 = vst [vmem:[%s289 + $0x3c] sm:$0xf] %v2668
        %2733 = vst [vmem:[%s289 + $0x40] sm:$0xf] %v2669
        %2734 = vst [vmem:[%s289 + $0x44] sm:$0xf] %v2670
        %2735 = vst [vmem:[%s289 + $0x48] sm:$0xf] %v2671
        %2736 = vst [vmem:[%s289 + $0x4c] sm:$0xf] %v2672
        %2737 = vst [vmem:[%s289 + $0x50] sm:$0xf] %v2673
        %2738 = vst [vmem:[%s289 + $0x54] sm:$0xf] %v2674
        %2739 = vst [vmem:[%s289 + $0x58] sm:$0xf] %v2675
        %2740 = vst [vmem:[%s289 + $0x5c] sm:$0xf] %v2676
        %2741 = vst [vmem:[%s289 + $0x60] sm:$0xf] %v2677
        %2742 = vst [vmem:[%s289 + $0x64] sm:$0xf] %v2678
        %2743 = vst [vmem:[%s289 + $0x68] sm:$0xf] %v2679
        %2744 = vst [vmem:[%s289 + $0x6c] sm:$0xf] %v2680
        %2745 = vst [vmem:[%s289 + $0x70] sm:$0xf] %v2681
        %2746 = vst [vmem:[%s289 + $0x74] sm:$0xf] %v2682
        %2747 = vst [vmem:[%s289 + $0x78] sm:$0xf] %v2683
        %2748 = vst [vmem:[%s289 + $0x7c] sm:$0xf] %v2684
        %s2749 = sand.u32 %s181, 1
        %s2750 = scalar_lea.sflag [#allocation3], %s2749
        %s2751 = sand.u32 %s181, 1
        %s2752 = smul.addr %s2751, 128
        %s2753 = scalar_lea.vmem [#allocation2], %s2752
        // Predicated region
        $region49: #{tpu_custom_call.1} parent=47 // pred_check
          %p2754 = pneg %p191
        $region50: #{tpu_custom_call.1} parent=47 // pred_check_branch
          %2756 = sbr.rel (%p2754) target = $region52
        $region51: #{tpu_custom_call.1} parent=47 // pred_region
          %s2757 = smul.u32 32, %s21
          %s2758 = ssub.s32 63, %s2757
          %p2759 = scmp.lt.s32.totalorder %s2758, 32
          %s2760 = scalar_select %p2759, %s2758, 32
          %s2761 = smul.u32 64, %s2760
          %s2763 = ssub.s32 2048, %s2761
          %2764 = vsyncadd %s2750, %s2763
          %p2765 = scmp.ne.s32.totalorder 0, %s2761
          %s2766 = smul.addr %s2757, 64
          %s2767 = scalar_lea.hbm %s7, %s2766
          %s2768 = smul.u32 4, %s2760
          %s2769 = sshll.u32 %s2753, 4
          %s2770 = int_to_ptr.vmem [resolvable:$true] %s2769
          %s2771 = sshll.u32 %s2768, 4
          %2775 = dma.vmem_to_hbm [thread:$0]  (%p2765), %s2770, %s2771, %s2767, %s2750, 64, 64, 4
        $region52: #{tpu_custom_call.1} parent=47 // pred_fallthru
          _
      $region48: #{tpu_custom_call.1} parent=5 // pred_fallthru
        _
      %p2776 = scmp.le.s32.totalorder 2, %s16
      // Predicated region
      $region53: #{tpu_custom_call.1} parent=5 // pred_check
        %p2777 = pneg %p2776
      $region54: #{tpu_custom_call.1} parent=5 // pred_check_branch
        %2779 = sbr.rel (%p2777) target = $region56
      $region55: #{tpu_custom_call.1} parent=5 // pred_region
        %s2780 = ssub.s32 %s16, 2
        // Predicated region
        $region57: #{tpu_custom_call.1} parent=55 // pred_check
          %p2781 = pneg %p197
        $region58: #{tpu_custom_call.1} parent=55 // pred_check_branch
          %2783 = sbr.rel (%p2781) target = $region60
        $region59: #{tpu_custom_call.1} parent=55 // pred_region
          %s2784 = sand.u32 %s182, 1
          %s2785 = scalar_lea.sflag [#allocation3], %s2784
          %s2786 = sand.u32 %s182, 1
          %s2787 = smul.addr %s2786, 128
          %s2788 = scalar_lea.vmem [#allocation2], %s2787
          %2789 = dma.done %s2785, 2048
        $region60: #{tpu_custom_call.1} parent=55 // pred_fallthru
          _
      $region56: #{tpu_custom_call.1} parent=5 // pred_fallthru
        _
    $region6: #{tpu_custom_call.1} parent=1 // loop_footer
      %s20 = sadd.s32 1, %s16
    $region7: #{tpu_custom_call.1} parent=1 // loop_footer_branch
      %15 = sbr.rel target = $region3
    $region8: #{tpu_custom_call.1} parent=1 // loop_exit
      _
    %2790 = vsyncpa [#allocation3], 1
    %s2791 = scalar_lea.sflag [#allocation3], 1
    %2792 = vsyncpa %s2791, 1

</llo_original>
